<compile_context>
chip_gen: v7x
topology: tpu7x:2x2x1
jax: 0.10.0
libtpu: 0.0.40
codegen_flags: <defaults>
</compile_context>

<pallas_src>
import functools

import jax
import jax.numpy as jnp
from jax import lax
from jax.experimental import pallas as pl
from jax.experimental.pallas import tpu as pltpu

NEG_SLOPE = 0.2       # leaky_relu negative slope
MASK_BIAS = -1e30     # additive softmax mask; keep f32 (would overflow in bf16)
CLS_PAD = 128         # lane-dense padding of the class dim for the output store


def _gat_layer(h_parts, w_parts, bias, num_heads, head_dim):
    """One multi-head GATConv on VMEM-resident values.

    h_parts : list of (N, Kp) f32 blocks -- the layer input partitioned along the
              contraction axis (so previous-layer head outputs never need a
              lane-axis concatenation).
    w_parts : matching list of (Kp, H*D + 2H) bf16 blocks of the augmented weight
              laid out as [ W_0 | ... | W_{H-1} | a_r (H cols) | a_l (H cols) ].
    bias    : (N, N) f32, 0 where edge j->i exists, -1e30 otherwise.
    Returns a list of H arrays (N, D) f32 with ELU already applied.
    """
    HD = num_heads * head_dim

    # Single fused MXU push per input block: yields z, er and el together.
    zer = None
    for hp, wp in zip(h_parts, w_parts):
        part = jnp.dot(hp.astype(jnp.bfloat16), wp,
                       preferred_element_type=jnp.float32)
        zer = part if zer is None else zer + part            # (N, H*D + 2H)

    z = zer[:, :HD]                                          # (N, H*D)
    er = zer[:, HD:HD + num_heads]                           # (N, H) dest scores
    el = zer[:, HD + num_heads:HD + 2 * num_heads]           # (N, H) src scores
    # Column->row flip of the source scores rides the XLU slot (off the MXU path).
    el_t = jnp.transpose(el)                                 # (H, N)

    outs = []
    for hd in range(num_heads):                              # static unroll, H <= 2
        # e[i, j] = leaky_relu(el[j] + er[i])
        e = er[:, hd:hd + 1] + el_t[hd:hd + 1, :]            # (N, N)
        e = jnp.maximum(e, NEG_SLOPE * e)                    # leaky_relu as one vmax
        sc = e + bias                                        # masked edges -> ~-1e30
        m = jnp.max(sc, axis=-1, keepdims=True)              # finite (self-loops)
        p = jnp.exp(sc - m)                                  # masked -> exactly 0
        inv = pl.reciprocal(jnp.sum(p, axis=-1, keepdims=True), approx=True)
        zh = z[:, hd * head_dim:(hd + 1) * head_dim]         # (N, D)
        # Deferred softmax normalization: matmul un-normalized p, rescale (N, D).
        r = jnp.dot(p.astype(jnp.bfloat16), zh.astype(jnp.bfloat16),
                    preferred_element_type=jnp.float32)
        r = r * inv
        # ELU(alpha=1); exp(min(r,0)) keeps the untaken branch finite.
        outs.append(jnp.where(r > 0, r, jnp.exp(jnp.minimum(r, 0.0)) - 1.0))
    return outs


def gat_fused_kernel(adj_ref, x_ref, w0_ref, w1_ref, out_ref, *,
                     heads0, dim0, heads1, num_classes, dim1_padded):
    # Expand the int8 adjacency into the additive edge-softmax bias once;
    # it is reused by every head of both layers.
    adj = adj_ref[...].astype(jnp.float32)
    bias = jnp.where(adj > 0, 0.0, MASK_BIAS)                # (N, N) f32

    # Hidden layer: H0 heads; .flatten(1) is handled implicitly below.
    outs0 = _gat_layer([x_ref[...]], [w0_ref[...]], bias, heads0, dim0)

    # Output layer: no lane-concat of the hidden heads -- split the layer-1
    # augmented weight into per-head row blocks and sum the partial matmuls.
    w1 = w1_ref[...]
    w1_parts = [w1[hd * dim0:(hd + 1) * dim0, :] for hd in range(heads0)]
    outs1 = _gat_layer(outs0, w1_parts, bias, heads1, dim1_padded)

    logits = outs1[0]
    for o in outs1[1:]:
        logits = logits + o
    logits = logits * (1.0 / float(heads1))                  # mean over heads

    # Mask the lane padding (classes live in the first `num_classes` lanes),
    # then class softmax.  Exact division keeps rows summing to 1.
    lane = lax.broadcasted_iota(jnp.int32, (1, dim1_padded), 1)
    logits = logits + jnp.where(lane < num_classes, 0.0, MASK_BIAS)
    m = jnp.max(logits, axis=-1, keepdims=True)
    p = jnp.exp(logits - m)
    out_ref[...] = (p / jnp.sum(p, axis=-1, keepdims=True)).astype(out_ref.dtype)


def _cost_estimate(N, fin0, heads0, dim0, heads1, dim1p):
    fin1 = heads0 * dim0
    flops = 2 * N * fin0 * (heads0 * dim0 + 2 * heads0)            # layer-0 projection
    flops += heads0 * (2 * N * N * dim0 + 8 * N * N)               # layer-0 attn + elementwise
    flops += 2 * N * fin1 * (heads1 * dim1p + 2 * heads1)          # layer-1 projection
    flops += heads1 * (2 * N * N * dim1p + 8 * N * N)              # layer-1 attn + elementwise
    transcendentals = (heads0 + heads1) * N * N + heads0 * N * dim0 \
        + heads1 * N * dim1p + N * dim1p
    bytes_accessed = N * N + 4 * N * fin0 \
        + 2 * fin0 * (heads0 * dim0 + 2 * heads0) \
        + 2 * fin1 * (heads1 * dim1p + 2 * heads1) + 4 * N * dim1p
    return pl.CostEstimate(flops=int(flops), transcendentals=int(transcendentals),
                           bytes_accessed=int(bytes_accessed))


def gat_forward_pallas(x, w0_aug, w1_aug, adj, *, heads0, dim0, heads1,
                       num_classes, dim1_padded=CLS_PAD):
    """Full GAT forward (both layers, head flatten/mean, class softmax): 1 launch."""
    N, fin0 = x.shape
    kernel = functools.partial(gat_fused_kernel, heads0=heads0, dim0=dim0,
                               heads1=heads1, num_classes=num_classes,
                               dim1_padded=dim1_padded)
    vmem = pl.BlockSpec(memory_space=pltpu.MemorySpace.VMEM)
    # TODO(synk): for large graphs, tile destination-node rows with a ("parallel",)
    # grid (bias/x/output blocked on rows, weights full) to use both v7x
    # TensorCores and stay under v7x's 64 MiB VMEM / v5e's 16 MiB scoped default;
    # move the adjacency to a block-sparse, scalar-prefetched layout at scale.
    out = pl.pallas_call(
        kernel,
        out_shape=jax.ShapeDtypeStruct((N, dim1_padded), jnp.float32),
        in_specs=[vmem] * 4,
        out_specs=vmem,
        cost_estimate=_cost_estimate(N, fin0, heads0, dim0, heads1, dim1_padded),
    )(adj, x, w0_aug, w1_aug)
    return out[:, :num_classes]


def pack_gat_layer(w, attn_l, attn_r, out_pad=None):
    """Pack per-head params (H,Fin,D)/(H,1,D) into one augmented bf16 operand.

    Columns of the returned (Fin, H*Dp + 2H) matrix (Dp = out_pad or D):
      [h*Dp : h*Dp+D]   = W_h            (zero-padded to Dp)
      [H*Dp + h]        = W_h @ attn_r_h (destination score er)
      [H*Dp + H + h]    = W_h @ attn_l_h (source score el)
    so a single `h @ w_aug` MXU push yields z, er and el together.
    """
    H, Fin, D = w.shape
    Dp = D if out_pad is None else out_pad
    w_p = jnp.pad(w, ((0, 0), (0, 0), (0, Dp - D)))
    w_all = jnp.transpose(w_p, (1, 0, 2)).reshape(Fin, H * Dp)
    a_r = jnp.einsum("hfd,hd->fh", w, attn_r[:, 0, :])
    a_l = jnp.einsum("hfd,hd->fh", w, attn_l[:, 0, :])
    return jnp.concatenate([w_all, a_r, a_l], axis=1).astype(jnp.bfloat16)


if __name__ == "__main__":
    key = jax.random.PRNGKey(0)
    N = 64            # number of graph nodes
    in_dim = 16
    num_hidden = 32
    num_classes = 8
    heads = [2, 1]    # num_layers = 1 -> [hidden-layer heads, output heads]

    k_adj, kx, k0w, k0a, k0b, k1w, k1a, k1b = jax.random.split(key, 8)

    # Deterministic random directed graph with self-loops: adj[i, j]=1 iff j -> i.
    adj = jax.random.uniform(k_adj, (N, N)) < 0.25
    adj = jnp.logical_or(adj, jnp.eye(N, dtype=bool)).astype(jnp.int8)

    x = jax.random.normal(kx, (N, in_dim), dtype=jnp.float32)

    def init_layer(kw, ka, kb, fin, H, D):
        scale = 1.0 / jnp.sqrt(float(fin))
        w = jax.random.normal(kw, (H, fin, D), dtype=jnp.float32) * scale
        al = jax.random.normal(ka, (H, 1, D), dtype=jnp.float32) * 0.1
        ar = jax.random.normal(kb, (H, 1, D), dtype=jnp.float32) * 0.1
        return w, al, ar

    w0, al0, ar0 = init_layer(k0w, k0a, k0b, in_dim, heads[0], num_hidden)
    w1, al1, ar1 = init_layer(k1w, k1a, k1b, num_hidden * heads[0], heads[1], num_classes)

    w0_aug = pack_gat_layer(w0, al0, ar0)
    w1_aug = pack_gat_layer(w1, al1, ar1, out_pad=CLS_PAD)

    forward = jax.jit(functools.partial(
        gat_forward_pallas, heads0=heads[0], dim0=num_hidden,
        heads1=heads[1], num_classes=num_classes))

    logits = jax.block_until_ready(forward(x, w0_aug, w1_aug, adj))

    assert logits.shape == (N, num_classes)
    assert bool(jnp.all(jnp.isfinite(logits)))
    assert bool(jnp.allclose(jnp.sum(logits, axis=-1), 1.0, atol=1e-5))
    print("KERNEL_OK")
</pallas_src>

<mosaic_0001>
module attributes {stable_mosaic.version = 11 : i64} {
  func.func @gat_fused_kernel(%arg0: memref<64x64xi8, #tpu.memory_space<vmem>>, %arg1: memref<64x16xf32, #tpu.memory_space<vmem>>, %arg2: memref<16x68xbf16, #tpu.memory_space<vmem>>, %arg3: memref<64x130xbf16, #tpu.memory_space<vmem>>, %arg4: memref<64x128xf32, #tpu.memory_space<vmem>>) attributes {dimension_semantics = [], scalar_prefetch = 0 : i64, scratch_operands = 0 : i64, tpu.core_type = #tpu.core_type<tc>} {
    %c0 = arith.constant 0 : index
    %c0_0 = arith.constant 0 : index
    %0 = vector.load %arg0[%c0, %c0_0] : memref<64x64xi8, #tpu.memory_space<vmem>>, vector<64x64xi8>
    %1 = arith.sitofp %0 : vector<64x64xi8> to vector<64x64xf32>
    %cst = arith.constant 0.000000e+00 : f32
    %2 = vector.broadcast %cst : f32 to vector<64x64xf32>
    %3 = arith.cmpf ogt, %1, %2 : vector<64x64xf32>
    %cst_1 = arith.constant 0.000000e+00 : f32
    %cst_2 = arith.constant -1.000000e+30 : f32
    %4 = vector.broadcast %cst_1 : f32 to vector<64x64xf32>
    %5 = vector.broadcast %cst_2 : f32 to vector<64x64xf32>
    %6 = arith.select %3, %4, %5 : vector<64x64xi1>, vector<64x64xf32>
    %c0_3 = arith.constant 0 : index
    %c0_4 = arith.constant 0 : index
    %7 = vector.load %arg1[%c0_3, %c0_4] : memref<64x16xf32, #tpu.memory_space<vmem>>, vector<64x16xf32>
    %c0_5 = arith.constant 0 : index
    %c0_6 = arith.constant 0 : index
    %8 = vector.load %arg2[%c0_5, %c0_6] : memref<16x68xbf16, #tpu.memory_space<vmem>>, vector<16x68xbf16>
    %9 = arith.truncf %7 : vector<64x16xf32> to vector<64x16xbf16>
    %cst_7 = arith.constant dense<0.000000e+00> : vector<64x68xf32>
    %10 = tpu.matmul %9, %8, %cst_7 {dimension_numbers = #tpu.dot_dimension_numbers<[1], [0], [0], [1], [0, 0, 1, 1], [], []>} : vector<64x16xbf16>, vector<16x68xbf16>, vector<64x68xf32> -> vector<64x68xf32>
    %11 = vector.extract_strided_slice %10 {offsets = [0, 0], sizes = [64, 64], strides = [1, 1]} : vector<64x68xf32> to vector<64x64xf32>
    %12 = vector.extract_strided_slice %10 {offsets = [0, 64], sizes = [64, 2], strides = [1, 1]} : vector<64x68xf32> to vector<64x2xf32>
    %13 = vector.extract_strided_slice %10 {offsets = [0, 66], sizes = [64, 2], strides = [1, 1]} : vector<64x68xf32> to vector<64x2xf32>
    %14 = tpu.transpose %13, [1, 0] : vector<64x2xf32> -> vector<2x64xf32>
    %15 = vector.extract_strided_slice %12 {offsets = [0, 0], sizes = [64, 1], strides = [1, 1]} : vector<64x2xf32> to vector<64x1xf32>
    %16 = vector.extract_strided_slice %14 {offsets = [0, 0], sizes = [1, 64], strides = [1, 1]} : vector<2x64xf32> to vector<1x64xf32>
    %17 = vector.broadcast %15 : vector<64x1xf32> to vector<64x64xf32>
    %18 = vector.broadcast %16 : vector<1x64xf32> to vector<64x64xf32>
    %19 = arith.addf %17, %18 : vector<64x64xf32>
    %cst_8 = arith.constant 2.000000e-01 : f32
    %20 = vector.broadcast %cst_8 : f32 to vector<64x64xf32>
    %21 = arith.mulf %20, %19 : vector<64x64xf32>
    %22 = arith.maximumf %19, %21 : vector<64x64xf32>
    %23 = arith.addf %22, %6 : vector<64x64xf32>
    %cst_9 = arith.constant dense<0xFF800000> : vector<64xf32>
    %24 = vector.multi_reduction <maximumf>, %23, %cst_9 [1] : vector<64x64xf32> to vector<64xf32>
    %25 = vector.shape_cast %24 : vector<64xf32> to vector<64x1xf32>
    %26 = vector.broadcast %25 : vector<64x1xf32> to vector<64x64xf32>
    %27 = arith.subf %23, %26 : vector<64x64xf32>
    %28 = math.exp %27 : vector<64x64xf32>
    %cst_10 = arith.constant dense<0.000000e+00> : vector<64xf32>
    %29 = vector.multi_reduction <add>, %28, %cst_10 [1] : vector<64x64xf32> to vector<64xf32>
    %30 = vector.shape_cast %29 : vector<64xf32> to vector<64x1xf32>
    %31 = tpu.reciprocal %30 {approx = true} : vector<64x1xf32> -> vector<64x1xf32>
    %32 = vector.extract_strided_slice %11 {offsets = [0, 0], sizes = [64, 32], strides = [1, 1]} : vector<64x64xf32> to vector<64x32xf32>
    %33 = arith.truncf %28 : vector<64x64xf32> to vector<64x64xbf16>
    %34 = arith.truncf %32 : vector<64x32xf32> to vector<64x32xbf16>
    %cst_11 = arith.constant dense<0.000000e+00> : vector<64x32xf32>
    %35 = tpu.matmul %33, %34, %cst_11 {dimension_numbers = #tpu.dot_dimension_numbers<[1], [0], [0], [1], [0, 0, 1, 1], [], []>} : vector<64x64xbf16>, vector<64x32xbf16>, vector<64x32xf32> -> vector<64x32xf32>
    %36 = vector.broadcast %31 : vector<64x1xf32> to vector<64x32xf32>
    %37 = arith.mulf %35, %36 : vector<64x32xf32>
    %cst_12 = arith.constant 0.000000e+00 : f32
    %38 = vector.broadcast %cst_12 : f32 to vector<64x32xf32>
    %39 = arith.cmpf ogt, %37, %38 : vector<64x32xf32>
    %cst_13 = arith.constant 0.000000e+00 : f32
    %40 = vector.broadcast %cst_13 : f32 to vector<64x32xf32>
    %41 = arith.minimumf %37, %40 : vector<64x32xf32>
    %42 = math.exp %41 : vector<64x32xf32>
    %cst_14 = arith.constant 1.000000e+00 : f32
    %43 = vector.broadcast %cst_14 : f32 to vector<64x32xf32>
    %44 = arith.subf %42, %43 : vector<64x32xf32>
    %45 = arith.select %39, %37, %44 : vector<64x32xi1>, vector<64x32xf32>
    %46 = vector.extract_strided_slice %12 {offsets = [0, 1], sizes = [64, 1], strides = [1, 1]} : vector<64x2xf32> to vector<64x1xf32>
    %47 = vector.extract_strided_slice %14 {offsets = [1, 0], sizes = [1, 64], strides = [1, 1]} : vector<2x64xf32> to vector<1x64xf32>
    %48 = vector.broadcast %46 : vector<64x1xf32> to vector<64x64xf32>
    %49 = vector.broadcast %47 : vector<1x64xf32> to vector<64x64xf32>
    %50 = arith.addf %48, %49 : vector<64x64xf32>
    %cst_15 = arith.constant 2.000000e-01 : f32
    %51 = vector.broadcast %cst_15 : f32 to vector<64x64xf32>
    %52 = arith.mulf %51, %50 : vector<64x64xf32>
    %53 = arith.maximumf %50, %52 : vector<64x64xf32>
    %54 = arith.addf %53, %6 : vector<64x64xf32>
    %cst_16 = arith.constant dense<0xFF800000> : vector<64xf32>
    %55 = vector.multi_reduction <maximumf>, %54, %cst_16 [1] : vector<64x64xf32> to vector<64xf32>
    %56 = vector.shape_cast %55 : vector<64xf32> to vector<64x1xf32>
    %57 = vector.broadcast %56 : vector<64x1xf32> to vector<64x64xf32>
    %58 = arith.subf %54, %57 : vector<64x64xf32>
    %59 = math.exp %58 : vector<64x64xf32>
    %cst_17 = arith.constant dense<0.000000e+00> : vector<64xf32>
    %60 = vector.multi_reduction <add>, %59, %cst_17 [1] : vector<64x64xf32> to vector<64xf32>
    %61 = vector.shape_cast %60 : vector<64xf32> to vector<64x1xf32>
    %62 = tpu.reciprocal %61 {approx = true} : vector<64x1xf32> -> vector<64x1xf32>
    %63 = vector.extract_strided_slice %11 {offsets = [0, 32], sizes = [64, 32], strides = [1, 1]} : vector<64x64xf32> to vector<64x32xf32>
    %64 = arith.truncf %59 : vector<64x64xf32> to vector<64x64xbf16>
    %65 = arith.truncf %63 : vector<64x32xf32> to vector<64x32xbf16>
    %cst_18 = arith.constant dense<0.000000e+00> : vector<64x32xf32>
    %66 = tpu.matmul %64, %65, %cst_18 {dimension_numbers = #tpu.dot_dimension_numbers<[1], [0], [0], [1], [0, 0, 1, 1], [], []>} : vector<64x64xbf16>, vector<64x32xbf16>, vector<64x32xf32> -> vector<64x32xf32>
    %67 = vector.broadcast %62 : vector<64x1xf32> to vector<64x32xf32>
    %68 = arith.mulf %66, %67 : vector<64x32xf32>
    %cst_19 = arith.constant 0.000000e+00 : f32
    %69 = vector.broadcast %cst_19 : f32 to vector<64x32xf32>
    %70 = arith.cmpf ogt, %68, %69 : vector<64x32xf32>
    %cst_20 = arith.constant 0.000000e+00 : f32
    %71 = vector.broadcast %cst_20 : f32 to vector<64x32xf32>
    %72 = arith.minimumf %68, %71 : vector<64x32xf32>
    %73 = math.exp %72 : vector<64x32xf32>
    %cst_21 = arith.constant 1.000000e+00 : f32
    %74 = vector.broadcast %cst_21 : f32 to vector<64x32xf32>
    %75 = arith.subf %73, %74 : vector<64x32xf32>
    %76 = arith.select %70, %68, %75 : vector<64x32xi1>, vector<64x32xf32>
    %c0_22 = arith.constant 0 : index
    %c0_23 = arith.constant 0 : index
    %77 = vector.load %arg3[%c0_22, %c0_23] : memref<64x130xbf16, #tpu.memory_space<vmem>>, vector<64x130xbf16>
    %78 = vector.extract_strided_slice %77 {offsets = [0, 0], sizes = [32, 130], strides = [1, 1]} : vector<64x130xbf16> to vector<32x130xbf16>
    %79 = vector.extract_strided_slice %77 {offsets = [32, 0], sizes = [32, 130], strides = [1, 1]} : vector<64x130xbf16> to vector<32x130xbf16>
    %80 = arith.truncf %45 : vector<64x32xf32> to vector<64x32xbf16>
    %cst_24 = arith.constant dense<0.000000e+00> : vector<64x130xf32>
    %81 = tpu.matmul %80, %78, %cst_24 {dimension_numbers = #tpu.dot_dimension_numbers<[1], [0], [0], [1], [0, 0, 1, 1], [], []>} : vector<64x32xbf16>, vector<32x130xbf16>, vector<64x130xf32> -> vector<64x130xf32>
    %82 = arith.truncf %76 : vector<64x32xf32> to vector<64x32xbf16>
    %cst_25 = arith.constant dense<0.000000e+00> : vector<64x130xf32>
    %83 = tpu.matmul %82, %79, %cst_25 {dimension_numbers = #tpu.dot_dimension_numbers<[1], [0], [0], [1], [0, 0, 1, 1], [], []>} : vector<64x32xbf16>, vector<32x130xbf16>, vector<64x130xf32> -> vector<64x130xf32>
    %84 = arith.addf %81, %83 : vector<64x130xf32>
    %85 = vector.extract_strided_slice %84 {offsets = [0, 0], sizes = [64, 128], strides = [1, 1]} : vector<64x130xf32> to vector<64x128xf32>
    %86 = vector.extract_strided_slice %84 {offsets = [0, 128], sizes = [64, 1], strides = [1, 1]} : vector<64x130xf32> to vector<64x1xf32>
    %87 = vector.extract_strided_slice %84 {offsets = [0, 129], sizes = [64, 1], strides = [1, 1]} : vector<64x130xf32> to vector<64x1xf32>
    %88 = tpu.transpose %87, [1, 0] : vector<64x1xf32> -> vector<1x64xf32>
    %89 = vector.broadcast %86 : vector<64x1xf32> to vector<64x64xf32>
    %90 = vector.broadcast %88 : vector<1x64xf32> to vector<64x64xf32>
    %91 = arith.addf %89, %90 : vector<64x64xf32>
    %cst_26 = arith.constant 2.000000e-01 : f32
    %92 = vector.broadcast %cst_26 : f32 to vector<64x64xf32>
    %93 = arith.mulf %92, %91 : vector<64x64xf32>
    %94 = arith.maximumf %91, %93 : vector<64x64xf32>
    %95 = arith.addf %94, %6 : vector<64x64xf32>
    %cst_27 = arith.constant dense<0xFF800000> : vector<64xf32>
    %96 = vector.multi_reduction <maximumf>, %95, %cst_27 [1] : vector<64x64xf32> to vector<64xf32>
    %97 = vector.shape_cast %96 : vector<64xf32> to vector<64x1xf32>
    %98 = vector.broadcast %97 : vector<64x1xf32> to vector<64x64xf32>
    %99 = arith.subf %95, %98 : vector<64x64xf32>
    %100 = math.exp %99 : vector<64x64xf32>
    %cst_28 = arith.constant dense<0.000000e+00> : vector<64xf32>
    %101 = vector.multi_reduction <add>, %100, %cst_28 [1] : vector<64x64xf32> to vector<64xf32>
    %102 = vector.shape_cast %101 : vector<64xf32> to vector<64x1xf32>
    %103 = tpu.reciprocal %102 {approx = true} : vector<64x1xf32> -> vector<64x1xf32>
    %104 = arith.truncf %100 : vector<64x64xf32> to vector<64x64xbf16>
    %105 = arith.truncf %85 : vector<64x128xf32> to vector<64x128xbf16>
    %cst_29 = arith.constant dense<0.000000e+00> : vector<64x128xf32>
    %106 = tpu.matmul %104, %105, %cst_29 {dimension_numbers = #tpu.dot_dimension_numbers<[1], [0], [0], [1], [0, 0, 1, 1], [], []>} : vector<64x64xbf16>, vector<64x128xbf16>, vector<64x128xf32> -> vector<64x128xf32>
    %107 = vector.broadcast %103 : vector<64x1xf32> to vector<64x128xf32>
    %108 = arith.mulf %106, %107 : vector<64x128xf32>
    %cst_30 = arith.constant 0.000000e+00 : f32
    %109 = vector.broadcast %cst_30 : f32 to vector<64x128xf32>
    %110 = arith.cmpf ogt, %108, %109 : vector<64x128xf32>
    %cst_31 = arith.constant 0.000000e+00 : f32
    %111 = vector.broadcast %cst_31 : f32 to vector<64x128xf32>
    %112 = arith.minimumf %108, %111 : vector<64x128xf32>
    %113 = math.exp %112 : vector<64x128xf32>
    %cst_32 = arith.constant 1.000000e+00 : f32
    %114 = vector.broadcast %cst_32 : f32 to vector<64x128xf32>
    %115 = arith.subf %113, %114 : vector<64x128xf32>
    %116 = arith.select %110, %108, %115 : vector<64x128xi1>, vector<64x128xf32>
    %cst_33 = arith.constant 1.000000e+00 : f32
    %117 = vector.broadcast %cst_33 : f32 to vector<64x128xf32>
    %118 = arith.mulf %116, %117 : vector<64x128xf32>
    %119 = tpu.iota {dimensions = array<i32: 1>} : vector<1x128xi32>
    %c8_i32 = arith.constant 8 : i32
    %120 = vector.broadcast %c8_i32 : i32 to vector<1x128xi32>
    %121 = arith.cmpi slt, %119, %120 : vector<1x128xi32>
    %cst_34 = arith.constant 0.000000e+00 : f32
    %cst_35 = arith.constant -1.000000e+30 : f32
    %122 = vector.broadcast %cst_34 : f32 to vector<1x128xf32>
    %123 = vector.broadcast %cst_35 : f32 to vector<1x128xf32>
    %124 = arith.select %121, %122, %123 : vector<1x128xi1>, vector<1x128xf32>
    %125 = vector.broadcast %124 : vector<1x128xf32> to vector<64x128xf32>
    %126 = arith.addf %118, %125 : vector<64x128xf32>
    %cst_36 = arith.constant dense<0xFF800000> : vector<64xf32>
    %127 = vector.multi_reduction <maximumf>, %126, %cst_36 [1] : vector<64x128xf32> to vector<64xf32>
    %128 = vector.shape_cast %127 : vector<64xf32> to vector<64x1xf32>
    %129 = vector.broadcast %128 : vector<64x1xf32> to vector<64x128xf32>
    %130 = arith.subf %126, %129 : vector<64x128xf32>
    %131 = math.exp %130 : vector<64x128xf32>
    %cst_37 = arith.constant dense<0.000000e+00> : vector<64xf32>
    %132 = vector.multi_reduction <add>, %131, %cst_37 [1] : vector<64x128xf32> to vector<64xf32>
    %133 = vector.shape_cast %132 : vector<64xf32> to vector<64x1xf32>
    %134 = vector.broadcast %133 : vector<64x1xf32> to vector<64x128xf32>
    %135 = arith.divf %131, %134 : vector<64x128xf32>
    %c0_38 = arith.constant 0 : index
    %c0_39 = arith.constant 0 : index
    %136 = vector.load %arg4[%c0_38, %c0_39] : memref<64x128xf32, #tpu.memory_space<vmem>>, vector<64x128xf32>
    tpu.vector_store %arg4[%c0_38, %c0_39], %135 {strides = array<i32>} : memref<64x128xf32, #tpu.memory_space<vmem>>, vector<64x128xf32>,
    return
  }
}

</mosaic_0001>

<llo_original>
// kernel: gat_forward_pallas.1
$region0: #{gat_forward_pallas.1}
  #allocation0 [shape = 'u32[]', space=smem, size = 0x4, offset = 0x4, fixed_abs, tag = 'smem constant byte address 0x4 - core index']
  #allocation1 [shape = 'u32[144,128]{1,0:T(1,128)}', space=vmem, size = 0x12000, scoped, tag = 'internal scratch']
  %s0 = inlined_call_operand.vmem [shape: s8[64,64], index: 0, kind: input, shape index: {}]
  %s1 = inlined_call_operand.vmem [shape: f32[64,16], index: 1, kind: input, shape index: {}]
  %s2 = inlined_call_operand.hbm [shape: bf16[16,68], index: 2, kind: input, shape index: {}]
  %s3 = inlined_call_operand.vmem [shape: bf16[64,130], index: 3, kind: input, shape index: {}]
  %s4 = inlined_call_operand.vmem [shape: f32[64,128], index: 4, kind: output, shape index: {}]
  %s5 = sld [smem:[#allocation0]]
  $region30: #{gat_forward_pallas.1} parent=0
    _
  %s7 = ssub.s32 1, %s5
  %s8 = scalar_select 0, %s7, %s5
  $region1: #{gat_forward_pallas.1} parent=0
    #allocation2 [shape = 'u8[4096]{0}', space=vmem, size = 0x1000, scoped, tag = 'input window, operand 2, single buffered']
    #allocation3 [shape = 's32[1]{0}', space=sflag, size = 0x4, scoped, tag = 'scoped memory for gat_forward_pallas.1']
    %9 = vsyncpa [#allocation3], 0
    // Predicated region
    $region2: #{gat_forward_pallas.1} parent=1 // pred_check
      _
    $region3: #{gat_forward_pallas.1} parent=1 // pred_check_branch
      %11 = sbr.rel (0) target = $region5
    $region4: #{gat_forward_pallas.1} parent=1 // pred_region
      _
    $region5: #{gat_forward_pallas.1} parent=1 // pred_fallthru
      _
    // Predicated region
    $region6: #{gat_forward_pallas.1} parent=1 // pred_check
      _
    $region7: #{gat_forward_pallas.1} parent=1 // pred_check_branch
      %13 = sbr.rel (0) target = $region9
    $region8: #{gat_forward_pallas.1} parent=1 // pred_region
      _
    $region9: #{gat_forward_pallas.1} parent=1 // pred_fallthru
      _
    // Predicated region
    $region10: #{gat_forward_pallas.1} parent=1 // pred_check
      _
    $region11: #{gat_forward_pallas.1} parent=1 // pred_check_branch
      %15 = sbr.rel (0) target = $region13
    $region12: #{gat_forward_pallas.1} parent=1 // pred_region
      %s17 = ssub.s32 128, 128
      %18 = vsyncadd [#allocation3], %s17
      %s19 = sshll.u32 [#allocation2], 4
      %s20 = int_to_ptr.vmem [resolvable:$true] %s19
      %25 = dma.hbm_to_vmem [thread:$0]  %s2, 128, %s20, [#allocation3], 64, 64, 4
    $region13: #{gat_forward_pallas.1} parent=1 // pred_fallthru
      _
    // Predicated region
    $region14: #{gat_forward_pallas.1} parent=1 // pred_check
      _
    $region15: #{gat_forward_pallas.1} parent=1 // pred_check_branch
      %27 = sbr.rel (0) target = $region17
    $region16: #{gat_forward_pallas.1} parent=1 // pred_region
      _
    $region17: #{gat_forward_pallas.1} parent=1 // pred_fallthru
      _
    // Predicated region
    $region18: #{gat_forward_pallas.1} parent=1 // pred_check
      _
    $region19: #{gat_forward_pallas.1} parent=1 // pred_check_branch
      %29 = sbr.rel (0) target = $region21
    $region20: #{gat_forward_pallas.1} parent=1 // pred_region
      %30 = dma.done [#allocation3], 128
    $region21: #{gat_forward_pallas.1} parent=1 // pred_fallthru
      _
    %v32 = vld [vmem:[%s0] sm:$0xff]
    %v33 = vld [vmem:[%s0 + $0x8] sm:$0xff]
    %v34 = vunpack.c.0.s8 %v32
    %v35 = vunpack.c.1.s8 %v32
    %v36 = vunpack.c.2.s8 %v32
    %v37 = vunpack.c.3.s8 %v32
    %v38 = vunpack.c.0.s8 %v33
    %v39 = vunpack.c.1.s8 %v33
    %v40 = vunpack.c.2.s8 %v33
    %v41 = vunpack.c.3.s8 %v33
    %v42 = vcvt.s32.f32 %v34
    %v43 = vcvt.s32.f32 %v35
    %v44 = vcvt.s32.f32 %v36
    %v45 = vcvt.s32.f32 %v37
    %v46 = vcvt.s32.f32 %v38
    %v47 = vcvt.s32.f32 %v39
    %v48 = vcvt.s32.f32 %v40
    %v49 = vcvt.s32.f32 %v41
    %vm50 = vcmp.gt.f32.partialorder %v42, 0.0
    %vm51 = vcmp.gt.f32.partialorder %v43, 0.0
    %vm52 = vcmp.gt.f32.partialorder %v44, 0.0
    %vm53 = vcmp.gt.f32.partialorder %v45, 0.0
    %vm54 = vcmp.gt.f32.partialorder %v46, 0.0
    %vm55 = vcmp.gt.f32.partialorder %v47, 0.0
    %vm56 = vcmp.gt.f32.partialorder %v48, 0.0
    %vm57 = vcmp.gt.f32.partialorder %v49, 0.0
    %v58 = vsel %vm50, 0.0, -1e+30
    %v59 = vsel %vm51, 0.0, -1e+30
    %v60 = vsel %vm52, 0.0, -1e+30
    %v61 = vsel %vm53, 0.0, -1e+30
    %v62 = vsel %vm54, 0.0, -1e+30
    %v63 = vsel %vm55, 0.0, -1e+30
    %v64 = vsel %vm56, 0.0, -1e+30
    %v65 = vsel %vm57, 0.0, -1e+30
    %v66 = vld [vmem:[%s1] sm:$0xff]
    %v67 = vld [vmem:[%s1 + $0x8] sm:$0xff]
    %v68 = vld [vmem:[%s1 + $0x10] sm:$0xff]
    %v69 = vld [vmem:[%s1 + $0x18] sm:$0xff]
    %v70 = vld [vmem:[%s1 + $0x20] sm:$0xff]
    %v71 = vld [vmem:[%s1 + $0x28] sm:$0xff]
    %v72 = vld [vmem:[%s1 + $0x30] sm:$0xff]
    %v73 = vld [vmem:[%s1 + $0x38] sm:$0xff]
    %v74 = vld [vmem:[#allocation2] sm:$0xf]
    %v75 = vld [vmem:[#allocation2 + $0x4] sm:$0xf]
    %v76 = vpack.c.bf16 %v67, %v66
    %v77 = vpack.c.bf16 %v69, %v68
    %v78 = vpack.c.bf16 %v71, %v70
    %v79 = vpack.c.bf16 %v73, %v72
    %v82 = vunpack.c.l.b16 %v74
    %v83 = vunpack.c.l.b16 %v75
    %v84 = vpack.c.b16 %v83, %v82
    %vm86 = vcmask 130048
    %v88 = vsel %vm86, %v76, 0
    %v91 = vsel %vm86, %v77, 0
    %v94 = vsel %vm86, %v78, 0
    %v97 = vsel %vm86, %v79, 0
    %99 = vmatprep.subr.bf16.mxu0 0
    %100 = vmatpush1.bf16.msra.mxu0 %v84
    %101 = vmatprep.subr.bf16.mxu0 0
    %102 = vmatpush1.bf16.msra.mxu0 0
    %103 = vmatprep.subr.bf16.mxu0 0
    %104 = vmatpush1.bf16.msra.mxu0 0
    %105 = vmatprep.subr.bf16.mxu0 0
    %106 = vmatpush1.bf16.msra.mxu0 0
    %107 = vmatprep.subr.bf16.mxu0 0
    %108 = vmatpush1.bf16.msra.mxu0 0
    %109 = vmatprep.subr.bf16.mxu0 0
    %110 = vmatpush1.bf16.msra.mxu0 0
    %111 = vmatprep.subr.bf16.mxu0 0
    %112 = vmatpush1.bf16.msra.mxu0 0
    %113 = vmatprep.subr.bf16.mxu0 0
    %114 = vmatpush1.bf16.msra.mxu0 0
    %115 = vmatprep.subr.bf16.mxu0 0
    %116 = vmatpush1.bf16.msra.mxu0 0
    %117 = vmatprep.subr.bf16.mxu0 0
    %118 = vmatpush1.bf16.msra.mxu0 0
    %119 = vmatprep.subr.bf16.mxu0 0
    %120 = vmatpush1.bf16.msra.mxu0 0
    %121 = vmatprep.subr.bf16.mxu0 0
    %122 = vmatpush1.bf16.msra.mxu0 0
    %123 = vmatprep.subr.bf16.mxu0 0
    %124 = vmatpush1.bf16.msra.mxu0 0
    %125 = vmatprep.subr.bf16.mxu0 0
    %126 = vmatpush1.bf16.msra.mxu0 0
    %127 = vmatprep.subr.bf16.mxu0 0
    %128 = vmatpush1.bf16.msra.mxu0 0
    %129 = vmatprep.subr.bf16.mxu0 0
    %130 = vmatpush1.bf16.msra.mxu0 0
    %131 = vmatprep.mubr.bf16.mxu0 0
    %132 = vmatmul.mubr.bf16.gmra.mrb[0].mxu0 %v88
    %v133 = vpop.f32.mrb[0].mxu0
    %v134 = vadd.f32 0.0, %v133
    %v135 = vpop.f32.mrb[0].mxu0
    %v136 = vpop.f32.mrb[0].mxu0
    %v137 = vadd.f32 0.0, %v136
    %v138 = vpop.f32.mrb[0].mxu0
    %139 = vmatprep.mubr.bf16.mxu0 0
    %140 = vmatmul.mubr.bf16.gmra.mrb[0].mxu0 %v91
    %v141 = vpop.f32.mrb[0].mxu0
    %v142 = vadd.f32 0.0, %v141
    %v143 = vpop.f32.mrb[0].mxu0
    %v144 = vpop.f32.mrb[0].mxu0
    %v145 = vadd.f32 0.0, %v144
    %v146 = vpop.f32.mrb[0].mxu0
    %147 = vmatprep.mubr.bf16.mxu0 0
    %148 = vmatmul.mubr.bf16.gmra.mrb[0].mxu0 %v94
    %v149 = vpop.f32.mrb[0].mxu0
    %v150 = vadd.f32 0.0, %v149
    %v151 = vpop.f32.mrb[0].mxu0
    %v152 = vpop.f32.mrb[0].mxu0
    %v153 = vadd.f32 0.0, %v152
    %v154 = vpop.f32.mrb[0].mxu0
    %155 = vmatprep.mubr.bf16.mxu0 0
    %156 = vmatmul.mubr.bf16.gmra.mrb[0].mxu0 %v97
    %v157 = vpop.f32.mrb[0].mxu0
    %v158 = vadd.f32 0.0, %v157
    %v159 = vpop.f32.mrb[0].mxu0
    %v160 = vpop.f32.mrb[0].mxu0
    %v161 = vadd.f32 0.0, %v160
    %v162 = vpop.f32.mrb[0].mxu0
    %163 = vdwg.mxu0
    %172 = vrot.lane.b32.xlu0 %v134, 62
    %v173 = vpop.permute.xlu0 %172
    %174 = vrot.lane.b32.xlu0 %v137, 62
    %v175 = vpop.permute.xlu0 %174
    %176 = vrot.lane.b32.xlu0 %v142, 62
    %v177 = vpop.permute.xlu0 %176
    %178 = vrot.lane.b32.xlu0 %v145, 62
    %v179 = vpop.permute.xlu0 %178
    %180 = vrot.lane.b32.xlu0 %v150, 62
    %v181 = vpop.permute.xlu0 %180
    %182 = vrot.lane.b32.xlu0 %v153, 62
    %v183 = vpop.permute.xlu0 %182
    %184 = vrot.lane.b32.xlu0 %v158, 62
    %v185 = vpop.permute.xlu0 %184
    %186 = vrot.lane.b32.xlu0 %v161, 62
    %v187 = vpop.permute.xlu0 %186
    %196 = vxpose.xlu0.b32.start [1/16] %v173, 128
    %197 = vxpose.xlu0.b32.cont [2/16] %v175, 128
    %198 = vxpose.xlu0.b32.cont [3/16] %v177, 128
    %199 = vxpose.xlu0.b32.cont [4/16] %v179, 128
    %200 = vxpose.xlu0.b32.cont [5/16] %v181, 128
    %201 = vxpose.xlu0.b32.cont [6/16] %v183, 128
    %202 = vxpose.xlu0.b32.cont [7/16] %v185, 128
    %203 = vxpose.xlu0.b32.cont [8/16] %v187, 128
    %204 = vxpose.xlu0.b32.cont [9/16] 0.0, 128
    %205 = vxpose.xlu0.b32.cont [10/16] 0.0, 128
    %206 = vxpose.xlu0.b32.cont [11/16] 0.0, 128
    %207 = vxpose.xlu0.b32.cont [12/16] 0.0, 128
    %208 = vxpose.xlu0.b32.cont [13/16] 0.0, 128
    %209 = vxpose.xlu0.b32.cont [14/16] 0.0, 128
    %210 = vxpose.xlu0.b32.cont [15/16] 0.0, 128
    %211 = vxpose.xlu0.b32.end [16/16] 0.0, 128
    %v212 = vpop.trf.xlu0
    %v213 = vpop.trf.xlu0
    %v214 = vpop.trf.xlu0
    %v215 = vpop.trf.xlu0
    %v216 = vpop.trf.xlu0
    %v217 = vpop.trf.xlu0
    %v218 = vpop.trf.xlu0
    %v219 = vpop.trf.xlu0
    %v220 = vpop.trf.xlu0
    %v221 = vpop.trf.xlu0
    %v222 = vpop.trf.xlu0
    %v223 = vpop.trf.xlu0
    %v224 = vpop.trf.xlu0
    %v225 = vpop.trf.xlu0
    %v226 = vpop.trf.xlu0
    %v227 = vpop.trf.xlu0
    %228 = vset.pattern.permute.xlu0 64
    %229 = vperm.xlu0 %228, %v134
    %v230 = vpop.permute.xlu0 %229
    %232 = vset.pattern.permute.xlu0 64
    %233 = vperm.xlu0 %232, %v137
    %v234 = vpop.permute.xlu0 %233
    %236 = vset.pattern.permute.xlu0 64
    %237 = vperm.xlu0 %236, %v142
    %v238 = vpop.permute.xlu0 %237
    %240 = vset.pattern.permute.xlu0 64
    %241 = vperm.xlu0 %240, %v145
    %v242 = vpop.permute.xlu0 %241
    %244 = vset.pattern.permute.xlu0 64
    %245 = vperm.xlu0 %244, %v150
    %v246 = vpop.permute.xlu0 %245
    %248 = vset.pattern.permute.xlu0 64
    %249 = vperm.xlu0 %248, %v153
    %v250 = vpop.permute.xlu0 %249
    %252 = vset.pattern.permute.xlu0 64
    %253 = vperm.xlu0 %252, %v158
    %v254 = vpop.permute.xlu0 %253
    %256 = vset.pattern.permute.xlu0 64
    %257 = vperm.xlu0 %256, %v161
    %v258 = vpop.permute.xlu0 %257
    %v260 = vlaneseq
    %v261 = vshrl.u32 %v260, 7
    %v262 = vsub.s32 0, %v261
    %v263 = vrot.slane %v212, %v262
    %v264 = vadd.f32 %v230, %v263
    %v265 = vadd.f32 %v234, %v263
    %v266 = vadd.f32 %v238, %v263
    %v267 = vadd.f32 %v242, %v263
    %v268 = vadd.f32 %v246, %v263
    %v269 = vadd.f32 %v250, %v263
    %v270 = vadd.f32 %v254, %v263
    %v271 = vadd.f32 %v258, %v263
    %v272 = vmul.f32 %v264, 0.2
    %v273 = vmul.f32 %v265, 0.2
    %v274 = vmul.f32 %v266, 0.2
    %v275 = vmul.f32 %v267, 0.2
    %v276 = vmul.f32 %v268, 0.2
    %v277 = vmul.f32 %v269, 0.2
    %v278 = vmul.f32 %v270, 0.2
    %v279 = vmul.f32 %v271, 0.2
    %v280 = vmax.f32 %v264, %v272
    %v281 = vmax.f32 %v265, %v273
    %v282 = vmax.f32 %v266, %v274
    %v283 = vmax.f32 %v267, %v275
    %v284 = vmax.f32 %v268, %v276
    %v285 = vmax.f32 %v269, %v277
    %v286 = vmax.f32 %v270, %v278
    %v287 = vmax.f32 %v271, %v279
    %v288 = vadd.f32 %v280, %v58
    %v289 = vadd.f32 %v281, %v59
    %v290 = vadd.f32 %v282, %v60
    %v291 = vadd.f32 %v283, %v61
    %v292 = vadd.f32 %v284, %v62
    %v293 = vadd.f32 %v285, %v63
    %v294 = vadd.f32 %v286, %v64
    %v295 = vadd.f32 %v287, %v65
    %vm296 = vcmask 523264
    %v297 = vsel %vm296, %v288, -inf
    %298 = vmax.xlane.f32.xlu0 %v297
    %v299 = vpop.xlane.xlu0 %298
    %v300 = vsel %vm296, %v289, -inf
    %301 = vmax.xlane.f32.xlu0 %v300
    %v302 = vpop.xlane.xlu0 %301
    %v303 = vsel %vm296, %v290, -inf
    %304 = vmax.xlane.f32.xlu0 %v303
    %v305 = vpop.xlane.xlu0 %304
    %v306 = vsel %vm296, %v291, -inf
    %307 = vmax.xlane.f32.xlu0 %v306
    %v308 = vpop.xlane.xlu0 %307
    %v309 = vsel %vm296, %v292, -inf
    %310 = vmax.xlane.f32.xlu0 %v309
    %v311 = vpop.xlane.xlu0 %310
    %v312 = vsel %vm296, %v293, -inf
    %313 = vmax.xlane.f32.xlu0 %v312
    %v314 = vpop.xlane.xlu0 %313
    %v315 = vsel %vm296, %v294, -inf
    %316 = vmax.xlane.f32.xlu0 %v315
    %v317 = vpop.xlane.xlu0 %316
    %v318 = vsel %vm296, %v295, -inf
    %319 = vmax.xlane.f32.xlu0 %v318
    %v320 = vpop.xlane.xlu0 %319
    %v321 = vsub.f32 %v288, %v299
    %v322 = vsub.f32 %v289, %v302
    %v323 = vsub.f32 %v290, %v305
    %v324 = vsub.f32 %v291, %v308
    %v325 = vsub.f32 %v292, %v311
    %v326 = vsub.f32 %v293, %v314
    %v327 = vsub.f32 %v294, %v317
    %v328 = vsub.f32 %v295, %v320
    %v329 = vmul.f32 %v321, 1.442695
    %v330 = vpow.pop %v329
    %v331 = vmul.f32 %v322, 1.442695
    %v332 = vpow.pop %v331
    %v333 = vmul.f32 %v323, 1.442695
    %v334 = vpow.pop %v333
    %v335 = vmul.f32 %v324, 1.442695
    %v336 = vpow.pop %v335
    %v337 = vmul.f32 %v325, 1.442695
    %v338 = vpow.pop %v337
    %v339 = vmul.f32 %v326, 1.442695
    %v340 = vpow.pop %v339
    %v341 = vmul.f32 %v327, 1.442695
    %v342 = vpow.pop %v341
    %v343 = vmul.f32 %v328, 1.442695
    %v344 = vpow.pop %v343
    %v345 = vsel %vm296, %v330, 0.0
    %346 = vadd.xlane.f32.xlu0 %v345
    %v347 = vpop.xlane.xlu0 %346
    %v348 = vsel %vm296, %v332, 0.0
    %349 = vadd.xlane.f32.xlu0 %v348
    %v350 = vpop.xlane.xlu0 %349
    %v351 = vsel %vm296, %v334, 0.0
    %352 = vadd.xlane.f32.xlu0 %v351
    %v353 = vpop.xlane.xlu0 %352
    %v354 = vsel %vm296, %v336, 0.0
    %355 = vadd.xlane.f32.xlu0 %v354
    %v356 = vpop.xlane.xlu0 %355
    %v357 = vsel %vm296, %v338, 0.0
    %358 = vadd.xlane.f32.xlu0 %v357
    %v359 = vpop.xlane.xlu0 %358
    %v360 = vsel %vm296, %v340, 0.0
    %361 = vadd.xlane.f32.xlu0 %v360
    %v362 = vpop.xlane.xlu0 %361
    %v363 = vsel %vm296, %v342, 0.0
    %364 = vadd.xlane.f32.xlu0 %v363
    %v365 = vpop.xlane.xlu0 %364
    %v366 = vsel %vm296, %v344, 0.0
    %367 = vadd.xlane.f32.xlu0 %v366
    %v368 = vpop.xlane.xlu0 %367
    %v369 = vrcp.pop %v347
    %v370 = vrcp.pop %v350
    %v371 = vrcp.pop %v353
    %v372 = vrcp.pop %v356
    %v373 = vrcp.pop %v359
    %v374 = vrcp.pop %v362
    %v375 = vrcp.pop %v365
    %v376 = vrcp.pop %v368
    %v377 = vpack.c.bf16 %v332, %v330
    %v378 = vpack.c.bf16 %v336, %v334
    %v379 = vpack.c.bf16 %v340, %v338
    %v380 = vpack.c.bf16 %v344, %v342
    %v381 = vpack.c.bf16 %v137, %v134
    %v382 = vpack.c.bf16 %v145, %v142
    %v383 = vpack.c.bf16 %v153, %v150
    %v384 = vpack.c.bf16 %v161, %v158
    %v386 = vsel %vm296, %v377, 0
    %v389 = vsel %vm296, %v378, 0
    %v392 = vsel %vm296, %v379, 0
    %v395 = vsel %vm296, %v380, 0
    %397 = vmatprep.subr.bf16.mxu0 0
    %398 = vmatpush1.bf16.msra.mxu0 %v381
    %399 = vmatprep.subr.bf16.mxu0 0
    %400 = vmatpush1.bf16.msra.mxu0 %v382
    %401 = vmatprep.subr.bf16.mxu0 0
    %402 = vmatpush1.bf16.msra.mxu0 %v383
    %403 = vmatprep.subr.bf16.mxu0 0
    %404 = vmatpush1.bf16.msra.mxu0 %v384
    %405 = vmatprep.subr.bf16.mxu0 0
    %406 = vmatpush1.bf16.msra.mxu0 0
    %407 = vmatprep.subr.bf16.mxu0 0
    %408 = vmatpush1.bf16.msra.mxu0 0
    %409 = vmatprep.subr.bf16.mxu0 0
    %410 = vmatpush1.bf16.msra.mxu0 0
    %411 = vmatprep.subr.bf16.mxu0 0
    %412 = vmatpush1.bf16.msra.mxu0 0
    %413 = vmatprep.subr.bf16.mxu0 0
    %414 = vmatpush1.bf16.msra.mxu0 0
    %415 = vmatprep.subr.bf16.mxu0 0
    %416 = vmatpush1.bf16.msra.mxu0 0
    %417 = vmatprep.subr.bf16.mxu0 0
    %418 = vmatpush1.bf16.msra.mxu0 0
    %419 = vmatprep.subr.bf16.mxu0 0
    %420 = vmatpush1.bf16.msra.mxu0 0
    %421 = vmatprep.subr.bf16.mxu0 0
    %422 = vmatpush1.bf16.msra.mxu0 0
    %423 = vmatprep.subr.bf16.mxu0 0
    %424 = vmatpush1.bf16.msra.mxu0 0
    %425 = vmatprep.subr.bf16.mxu0 0
    %426 = vmatpush1.bf16.msra.mxu0 0
    %427 = vmatprep.subr.bf16.mxu0 0
    %428 = vmatpush1.bf16.msra.mxu0 0
    %429 = vmatprep.mubr.bf16.mxu0 0
    %430 = vmatmul.mubr.bf16.gmra.mrb[0].mxu0 %v386
    %v431 = vpop.f32.mrb[0].mxu0
    %v432 = vadd.f32 0.0, %v431
    %v433 = vpop.f32.mrb[0].mxu0
    %v434 = vpop.f32.mrb[0].mxu0
    %v435 = vadd.f32 0.0, %v434
    %v436 = vpop.f32.mrb[0].mxu0
    %437 = vmatprep.mubr.bf16.mxu0 0
    %438 = vmatmul.mubr.bf16.gmra.mrb[0].mxu0 %v389
    %v439 = vpop.f32.mrb[0].mxu0
    %v440 = vadd.f32 0.0, %v439
    %v441 = vpop.f32.mrb[0].mxu0
    %v442 = vpop.f32.mrb[0].mxu0
    %v443 = vadd.f32 0.0, %v442
    %v444 = vpop.f32.mrb[0].mxu0
    %445 = vmatprep.mubr.bf16.mxu0 0
    %446 = vmatmul.mubr.bf16.gmra.mrb[0].mxu0 %v392
    %v447 = vpop.f32.mrb[0].mxu0
    %v448 = vadd.f32 0.0, %v447
    %v449 = vpop.f32.mrb[0].mxu0
    %v450 = vpop.f32.mrb[0].mxu0
    %v451 = vadd.f32 0.0, %v450
    %v452 = vpop.f32.mrb[0].mxu0
    %453 = vmatprep.mubr.bf16.mxu0 0
    %454 = vmatmul.mubr.bf16.gmra.mrb[0].mxu0 %v395
    %v455 = vpop.f32.mrb[0].mxu0
    %v456 = vadd.f32 0.0, %v455
    %v457 = vpop.f32.mrb[0].mxu0
    %v458 = vpop.f32.mrb[0].mxu0
    %v459 = vadd.f32 0.0, %v458
    %v460 = vpop.f32.mrb[0].mxu0
    %461 = vdwg.mxu0
    %v462 = vmul.f32 %v432, %v369
    %v463 = vmul.f32 %v435, %v370
    %v464 = vmul.f32 %v440, %v371
    %v465 = vmul.f32 %v443, %v372
    %v466 = vmul.f32 %v448, %v373
    %v467 = vmul.f32 %v451, %v374
    %v468 = vmul.f32 %v456, %v375
    %v469 = vmul.f32 %v459, %v376
    %vm470 = vcmp.gt.f32.partialorder %v462, 0.0
    %vm471 = vcmp.gt.f32.partialorder %v463, 0.0
    %vm472 = vcmp.gt.f32.partialorder %v464, 0.0
    %vm473 = vcmp.gt.f32.partialorder %v465, 0.0
    %vm474 = vcmp.gt.f32.partialorder %v466, 0.0
    %vm475 = vcmp.gt.f32.partialorder %v467, 0.0
    %vm476 = vcmp.gt.f32.partialorder %v468, 0.0
    %vm477 = vcmp.gt.f32.partialorder %v469, 0.0
    %v478 = vmin.f32 %v462, 0.0
    %v479 = vmin.f32 %v463, 0.0
    %v480 = vmin.f32 %v464, 0.0
    %v481 = vmin.f32 %v465, 0.0
    %v482 = vmin.f32 %v466, 0.0
    %v483 = vmin.f32 %v467, 0.0
    %v484 = vmin.f32 %v468, 0.0
    %v485 = vmin.f32 %v469, 0.0
    %v486 = vmul.f32 %v478, 1.442695
    %v487 = vpow.pop %v486
    %v488 = vmul.f32 %v479, 1.442695
    %v489 = vpow.pop %v488
    %v490 = vmul.f32 %v480, 1.442695
    %v491 = vpow.pop %v490
    %v492 = vmul.f32 %v481, 1.442695
    %v493 = vpow.pop %v492
    %v494 = vmul.f32 %v482, 1.442695
    %v495 = vpow.pop %v494
    %v496 = vmul.f32 %v483, 1.442695
    %v497 = vpow.pop %v496
    %v498 = vmul.f32 %v484, 1.442695
    %v499 = vpow.pop %v498
    %v500 = vmul.f32 %v485, 1.442695
    %v501 = vpow.pop %v500
    %v502 = vsub.f32 %v487, 1.0
    %v503 = vsub.f32 %v489, 1.0
    %v504 = vsub.f32 %v491, 1.0
    %v505 = vsub.f32 %v493, 1.0
    %v506 = vsub.f32 %v495, 1.0
    %v507 = vsub.f32 %v497, 1.0
    %v508 = vsub.f32 %v499, 1.0
    %v509 = vsub.f32 %v501, 1.0
    %v510 = vsel %vm470, %v462, %v502
    %v511 = vsel %vm471, %v463, %v503
    %v512 = vsel %vm472, %v464, %v504
    %v513 = vsel %vm473, %v465, %v505
    %v514 = vsel %vm474, %v466, %v506
    %v515 = vsel %vm475, %v467, %v507
    %v516 = vsel %vm476, %v468, %v508
    %v517 = vsel %vm477, %v469, %v509
    %518 = vset.pattern.permute.xlu0 65
    %519 = vperm.xlu0 %518, %v134
    %v520 = vpop.permute.xlu0 %519
    %522 = vset.pattern.permute.xlu0 65
    %523 = vperm.xlu0 %522, %v137
    %v524 = vpop.permute.xlu0 %523
    %526 = vset.pattern.permute.xlu0 65
    %527 = vperm.xlu0 %526, %v142
    %v528 = vpop.permute.xlu0 %527
    %530 = vset.pattern.permute.xlu0 65
    %531 = vperm.xlu0 %530, %v145
    %v532 = vpop.permute.xlu0 %531
    %534 = vset.pattern.permute.xlu0 65
    %535 = vperm.xlu0 %534, %v150
    %v536 = vpop.permute.xlu0 %535
    %538 = vset.pattern.permute.xlu0 65
    %539 = vperm.xlu0 %538, %v153
    %v540 = vpop.permute.xlu0 %539
    %542 = vset.pattern.permute.xlu0 65
    %543 = vperm.xlu0 %542, %v158
    %v544 = vpop.permute.xlu0 %543
    %546 = vset.pattern.permute.xlu0 65
    %547 = vperm.xlu0 %546, %v161
    %v548 = vpop.permute.xlu0 %547
    %v550 = vlaneseq
    %v551 = vshrl.u32 %v550, 7
    %v552 = vsub.s32 1, %v551
    %v553 = vrot.slane %v212, %v552
    %v554 = vadd.f32 %v520, %v553
    %v555 = vadd.f32 %v524, %v553
    %v556 = vadd.f32 %v528, %v553
    %v557 = vadd.f32 %v532, %v553
    %v558 = vadd.f32 %v536, %v553
    %v559 = vadd.f32 %v540, %v553
    %v560 = vadd.f32 %v544, %v553
    %v561 = vadd.f32 %v548, %v553
    %v562 = vmul.f32 %v554, 0.2
    %v563 = vmul.f32 %v555, 0.2
    %v564 = vmul.f32 %v556, 0.2
    %v565 = vmul.f32 %v557, 0.2
    %v566 = vmul.f32 %v558, 0.2
    %v567 = vmul.f32 %v559, 0.2
    %v568 = vmul.f32 %v560, 0.2
    %v569 = vmul.f32 %v561, 0.2
    %v570 = vmax.f32 %v554, %v562
    %v571 = vmax.f32 %v555, %v563
    %v572 = vmax.f32 %v556, %v564
    %v573 = vmax.f32 %v557, %v565
    %v574 = vmax.f32 %v558, %v566
    %v575 = vmax.f32 %v559, %v567
    %v576 = vmax.f32 %v560, %v568
    %v577 = vmax.f32 %v561, %v569
    %v578 = vadd.f32 %v570, %v58
    %v579 = vadd.f32 %v571, %v59
    %v580 = vadd.f32 %v572, %v60
    %v581 = vadd.f32 %v573, %v61
    %v582 = vadd.f32 %v574, %v62
    %v583 = vadd.f32 %v575, %v63
    %v584 = vadd.f32 %v576, %v64
    %v585 = vadd.f32 %v577, %v65
    %v586 = vsel %vm296, %v578, -inf
    %587 = vmax.xlane.f32.xlu0 %v586
    %v588 = vpop.xlane.xlu0 %587
    %v589 = vsel %vm296, %v579, -inf
    %590 = vmax.xlane.f32.xlu0 %v589
    %v591 = vpop.xlane.xlu0 %590
    %v592 = vsel %vm296, %v580, -inf
    %593 = vmax.xlane.f32.xlu0 %v592
    %v594 = vpop.xlane.xlu0 %593
    %v595 = vsel %vm296, %v581, -inf
    %596 = vmax.xlane.f32.xlu0 %v595
    %v597 = vpop.xlane.xlu0 %596
    %v598 = vsel %vm296, %v582, -inf
    %599 = vmax.xlane.f32.xlu0 %v598
    %v600 = vpop.xlane.xlu0 %599
    %v601 = vsel %vm296, %v583, -inf
    %602 = vmax.xlane.f32.xlu0 %v601
    %v603 = vpop.xlane.xlu0 %602
    %v604 = vsel %vm296, %v584, -inf
    %605 = vmax.xlane.f32.xlu0 %v604
    %v606 = vpop.xlane.xlu0 %605
    %v607 = vsel %vm296, %v585, -inf
    %608 = vmax.xlane.f32.xlu0 %v607
    %v609 = vpop.xlane.xlu0 %608
    %v610 = vsub.f32 %v578, %v588
    %v611 = vsub.f32 %v579, %v591
    %v612 = vsub.f32 %v580, %v594
    %v613 = vsub.f32 %v581, %v597
    %v614 = vsub.f32 %v582, %v600
    %v615 = vsub.f32 %v583, %v603
    %v616 = vsub.f32 %v584, %v606
    %v617 = vsub.f32 %v585, %v609
    %v618 = vmul.f32 %v610, 1.442695
    %v619 = vpow.pop %v618
    %v620 = vmul.f32 %v611, 1.442695
    %v621 = vpow.pop %v620
    %v622 = vmul.f32 %v612, 1.442695
    %v623 = vpow.pop %v622
    %v624 = vmul.f32 %v613, 1.442695
    %v625 = vpow.pop %v624
    %v626 = vmul.f32 %v614, 1.442695
    %v627 = vpow.pop %v626
    %v628 = vmul.f32 %v615, 1.442695
    %v629 = vpow.pop %v628
    %v630 = vmul.f32 %v616, 1.442695
    %v631 = vpow.pop %v630
    %v632 = vmul.f32 %v617, 1.442695
    %v633 = vpow.pop %v632
    %v634 = vsel %vm296, %v619, 0.0
    %635 = vadd.xlane.f32.xlu0 %v634
    %v636 = vpop.xlane.xlu0 %635
    %v637 = vsel %vm296, %v621, 0.0
    %638 = vadd.xlane.f32.xlu0 %v637
    %v639 = vpop.xlane.xlu0 %638
    %v640 = vsel %vm296, %v623, 0.0
    %641 = vadd.xlane.f32.xlu0 %v640
    %v642 = vpop.xlane.xlu0 %641
    %v643 = vsel %vm296, %v625, 0.0
    %644 = vadd.xlane.f32.xlu0 %v643
    %v645 = vpop.xlane.xlu0 %644
    %v646 = vsel %vm296, %v627, 0.0
    %647 = vadd.xlane.f32.xlu0 %v646
    %v648 = vpop.xlane.xlu0 %647
    %v649 = vsel %vm296, %v629, 0.0
    %650 = vadd.xlane.f32.xlu0 %v649
    %v651 = vpop.xlane.xlu0 %650
    %v652 = vsel %vm296, %v631, 0.0
    %653 = vadd.xlane.f32.xlu0 %v652
    %v654 = vpop.xlane.xlu0 %653
    %v655 = vsel %vm296, %v633, 0.0
    %656 = vadd.xlane.f32.xlu0 %v655
    %v657 = vpop.xlane.xlu0 %656
    %v658 = vrcp.pop %v636
    %v659 = vrcp.pop %v639
    %v660 = vrcp.pop %v642
    %v661 = vrcp.pop %v645
    %v662 = vrcp.pop %v648
    %v663 = vrcp.pop %v651
    %v664 = vrcp.pop %v654
    %v665 = vrcp.pop %v657
    %v666 = vpack.c.bf16 %v621, %v619
    %v667 = vpack.c.bf16 %v625, %v623
    %v668 = vpack.c.bf16 %v629, %v627
    %v669 = vpack.c.bf16 %v633, %v631
    %674 = vrot.lane.b32.xlu0 %v381, 96
    %v675 = vpop.permute.xlu0 %674
    %676 = vrot.lane.b32.xlu0 %v382, 96
    %v677 = vpop.permute.xlu0 %676
    %678 = vrot.lane.b32.xlu0 %v383, 96
    %v679 = vpop.permute.xlu0 %678
    %680 = vrot.lane.b32.xlu0 %v384, 96
    %v681 = vpop.permute.xlu0 %680
    %v687 = vsel %vm296, %v666, 0
    %v690 = vsel %vm296, %v667, 0
    %v693 = vsel %vm296, %v668, 0
    %v696 = vsel %vm296, %v669, 0
    %698 = vmatprep.subr.bf16.mxu0 0
    %699 = vmatpush1.bf16.msra.mxu0 %v675
    %700 = vmatprep.subr.bf16.mxu0 0
    %701 = vmatpush1.bf16.msra.mxu0 %v677
    %702 = vmatprep.subr.bf16.mxu0 0
    %703 = vmatpush1.bf16.msra.mxu0 %v679
    %704 = vmatprep.subr.bf16.mxu0 0
    %705 = vmatpush1.bf16.msra.mxu0 %v681
    %706 = vmatprep.subr.bf16.mxu0 0
    %707 = vmatpush1.bf16.msra.mxu0 0
    %708 = vmatprep.subr.bf16.mxu0 0
    %709 = vmatpush1.bf16.msra.mxu0 0
    %710 = vmatprep.subr.bf16.mxu0 0
    %711 = vmatpush1.bf16.msra.mxu0 0
    %712 = vmatprep.subr.bf16.mxu0 0
    %713 = vmatpush1.bf16.msra.mxu0 0
    %714 = vmatprep.subr.bf16.mxu0 0
    %715 = vmatpush1.bf16.msra.mxu0 0
    %716 = vmatprep.subr.bf16.mxu0 0
    %717 = vmatpush1.bf16.msra.mxu0 0
    %718 = vmatprep.subr.bf16.mxu0 0
    %719 = vmatpush1.bf16.msra.mxu0 0
    %720 = vmatprep.subr.bf16.mxu0 0
    %721 = vmatpush1.bf16.msra.mxu0 0
    %722 = vmatprep.subr.bf16.mxu0 0
    %723 = vmatpush1.bf16.msra.mxu0 0
    %724 = vmatprep.subr.bf16.mxu0 0
    %725 = vmatpush1.bf16.msra.mxu0 0
    %726 = vmatprep.subr.bf16.mxu0 0
    %727 = vmatpush1.bf16.msra.mxu0 0
    %728 = vmatprep.subr.bf16.mxu0 0
    %729 = vmatpush1.bf16.msra.mxu0 0
    %730 = vmatprep.mubr.bf16.mxu0 0
    %731 = vmatmul.mubr.bf16.gmra.mrb[0].mxu0 %v687
    %v732 = vpop.f32.mrb[0].mxu0
    %v733 = vadd.f32 0.0, %v732
    %v734 = vpop.f32.mrb[0].mxu0
    %v735 = vpop.f32.mrb[0].mxu0
    %v736 = vadd.f32 0.0, %v735
    %v737 = vpop.f32.mrb[0].mxu0
    %738 = vmatprep.mubr.bf16.mxu0 0
    %739 = vmatmul.mubr.bf16.gmra.mrb[0].mxu0 %v690
    %v740 = vpop.f32.mrb[0].mxu0
    %v741 = vadd.f32 0.0, %v740
    %v742 = vpop.f32.mrb[0].mxu0
    %v743 = vpop.f32.mrb[0].mxu0
    %v744 = vadd.f32 0.0, %v743
    %v745 = vpop.f32.mrb[0].mxu0
    %746 = vmatprep.mubr.bf16.mxu0 0
    %747 = vmatmul.mubr.bf16.gmra.mrb[0].mxu0 %v693
    %v748 = vpop.f32.mrb[0].mxu0
    %v749 = vadd.f32 0.0, %v748
    %v750 = vpop.f32.mrb[0].mxu0
    %v751 = vpop.f32.mrb[0].mxu0
    %v752 = vadd.f32 0.0, %v751
    %v753 = vpop.f32.mrb[0].mxu0
    %754 = vmatprep.mubr.bf16.mxu0 0
    %755 = vmatmul.mubr.bf16.gmra.mrb[0].mxu0 %v696
    %v756 = vpop.f32.mrb[0].mxu0
    %v757 = vadd.f32 0.0, %v756
    %v758 = vpop.f32.mrb[0].mxu0
    %v759 = vpop.f32.mrb[0].mxu0
    %v760 = vadd.f32 0.0, %v759
    %v761 = vpop.f32.mrb[0].mxu0
    %762 = vdwg.mxu0
    %v763 = vmul.f32 %v733, %v658
    %v764 = vmul.f32 %v736, %v659
    %v765 = vmul.f32 %v741, %v660
    %v766 = vmul.f32 %v744, %v661
    %v767 = vmul.f32 %v749, %v662
    %v768 = vmul.f32 %v752, %v663
    %v769 = vmul.f32 %v757, %v664
    %v770 = vmul.f32 %v760, %v665
    %vm771 = vcmp.gt.f32.partialorder %v763, 0.0
    %vm772 = vcmp.gt.f32.partialorder %v764, 0.0
    %vm773 = vcmp.gt.f32.partialorder %v765, 0.0
    %vm774 = vcmp.gt.f32.partialorder %v766, 0.0
    %vm775 = vcmp.gt.f32.partialorder %v767, 0.0
    %vm776 = vcmp.gt.f32.partialorder %v768, 0.0
    %vm777 = vcmp.gt.f32.partialorder %v769, 0.0
    %vm778 = vcmp.gt.f32.partialorder %v770, 0.0
    %v779 = vmin.f32 %v763, 0.0
    %v780 = vmin.f32 %v764, 0.0
    %v781 = vmin.f32 %v765, 0.0
    %v782 = vmin.f32 %v766, 0.0
    %v783 = vmin.f32 %v767, 0.0
    %v784 = vmin.f32 %v768, 0.0
    %v785 = vmin.f32 %v769, 0.0
    %v786 = vmin.f32 %v770, 0.0
    %v787 = vmul.f32 %v779, 1.442695
    %v788 = vpow.pop %v787
    %v789 = vmul.f32 %v780, 1.442695
    %v790 = vpow.pop %v789
    %v791 = vmul.f32 %v781, 1.442695
    %v792 = vpow.pop %v791
    %v793 = vmul.f32 %v782, 1.442695
    %v794 = vpow.pop %v793
    %v795 = vmul.f32 %v783, 1.442695
    %v796 = vpow.pop %v795
    %v797 = vmul.f32 %v784, 1.442695
    %v798 = vpow.pop %v797
    %v799 = vmul.f32 %v785, 1.442695
    %v800 = vpow.pop %v799
    %v801 = vmul.f32 %v786, 1.442695
    %v802 = vpow.pop %v801
    %v803 = vsub.f32 %v788, 1.0
    %v804 = vsub.f32 %v790, 1.0
    %v805 = vsub.f32 %v792, 1.0
    %v806 = vsub.f32 %v794, 1.0
    %v807 = vsub.f32 %v796, 1.0
    %v808 = vsub.f32 %v798, 1.0
    %v809 = vsub.f32 %v800, 1.0
    %v810 = vsub.f32 %v802, 1.0
    %v811 = vsel %vm771, %v763, %v803
    %v812 = vsel %vm772, %v764, %v804
    %v813 = vsel %vm773, %v765, %v805
    %v814 = vsel %vm774, %v766, %v806
    %v815 = vsel %vm775, %v767, %v807
    %v816 = vsel %vm776, %v768, %v808
    %v817 = vsel %vm777, %v769, %v809
    %v818 = vsel %vm778, %v770, %v810
    %v819 = vld [vmem:[%s3] sm:$0xff]
    %v820 = vld [vmem:[%s3 + $0x8] sm:$0xff]
    %v821 = vld [vmem:[%s3 + $0x10] sm:$0xff]
    %v822 = vld [vmem:[%s3 + $0x18] sm:$0xff]
    %v823 = vld [vmem:[%s3 + $0x20] sm:$0xff]
    %v824 = vld [vmem:[%s3 + $0x28] sm:$0xff]
    %v825 = vld [vmem:[%s3 + $0x30] sm:$0xff]
    %v826 = vld [vmem:[%s3 + $0x38] sm:$0xff]
    %v827 = vpack.c.bf16 %v511, %v510
    %v828 = vpack.c.bf16 %v513, %v512
    %v829 = vpack.c.bf16 %v515, %v514
    %v830 = vpack.c.bf16 %v517, %v516
    %v831 = vpack.c.bf16 %v812, %v811
    %v832 = vpack.c.bf16 %v814, %v813
    %v833 = vpack.c.bf16 %v816, %v815
    %v834 = vpack.c.bf16 %v818, %v817
    %v839 = vunpack.c.l.b16 %v823
    %v840 = vunpack.c.h.b16 %v823
    %v841 = vunpack.c.l.b16 %v824
    %v842 = vunpack.c.h.b16 %v824
    %v843 = vunpack.c.l.b16 %v825
    %v844 = vunpack.c.h.b16 %v825
    %v845 = vunpack.c.l.b16 %v826
    %v846 = vunpack.c.h.b16 %v826
    %v847 = vpack.c.b16 %v841, %v839
    %v848 = vpack.c.b16 %v842, %v840
    %v849 = vpack.c.b16 %v845, %v843
    %v850 = vpack.c.b16 %v846, %v844
    %vm855 = vcmask 261120
    %v857 = vsel %vm855, %v831, 0
    %v860 = vsel %vm855, %v832, 0
    %v863 = vsel %vm855, %v833, 0
    %v866 = vsel %vm855, %v834, 0
    %868 = vmatprep.subr.bf16.mxu0 %v848
    %869 = vmatpush1.bf16.msra.mxu0 %v847
    %870 = vmatprep.subr.bf16.mxu0 %v850
    %871 = vmatpush1.bf16.msra.mxu0 %v849
    %872 = vmatprep.subr.bf16.mxu0 0
    %873 = vmatpush1.bf16.msra.mxu0 0
    %874 = vmatprep.subr.bf16.mxu0 0
    %875 = vmatpush1.bf16.msra.mxu0 0
    %876 = vmatprep.subr.bf16.mxu0 0
    %877 = vmatpush1.bf16.msra.mxu0 0
    %878 = vmatprep.subr.bf16.mxu0 0
    %879 = vmatpush1.bf16.msra.mxu0 0
    %880 = vmatprep.subr.bf16.mxu0 0
    %881 = vmatpush1.bf16.msra.mxu0 0
    %882 = vmatprep.subr.bf16.mxu0 0
    %883 = vmatpush1.bf16.msra.mxu0 0
    %884 = vmatprep.subr.bf16.mxu0 0
    %885 = vmatpush1.bf16.msra.mxu0 0
    %886 = vmatprep.subr.bf16.mxu0 0
    %887 = vmatpush1.bf16.msra.mxu0 0
    %888 = vmatprep.subr.bf16.mxu0 0
    %889 = vmatpush1.bf16.msra.mxu0 0
    %890 = vmatprep.subr.bf16.mxu0 0
    %891 = vmatpush1.bf16.msra.mxu0 0
    %892 = vmatprep.subr.bf16.mxu0 0
    %893 = vmatpush1.bf16.msra.mxu0 0
    %894 = vmatprep.subr.bf16.mxu0 0
    %895 = vmatpush1.bf16.msra.mxu0 0
    %896 = vmatprep.subr.bf16.mxu0 0
    %897 = vmatpush1.bf16.msra.mxu0 0
    %898 = vmatprep.subr.bf16.mxu0 0
    %899 = vmatpush1.bf16.msra.mxu0 0
    %900 = vmatprep.mubr.bf16.mxu0 0
    %901 = vmatmul.mubr.bf16.gmra.mrb[0].mxu0 %v857
    %v902 = vpop.f32.mrb[0].mxu0
    %v903 = vadd.f32 0.0, %v902
    %v904 = vpop.f32.mrb[0].mxu0
    %v905 = vadd.f32 0.0, %v904
    %v906 = vpop.f32.mrb[0].mxu0
    %v907 = vadd.f32 0.0, %v906
    %v908 = vpop.f32.mrb[0].mxu0
    %v909 = vadd.f32 0.0, %v908
    %910 = vmatprep.mubr.bf16.mxu0 0
    %911 = vmatmul.mubr.bf16.gmra.mrb[0].mxu0 %v860
    %v912 = vpop.f32.mrb[0].mxu0
    %v913 = vadd.f32 0.0, %v912
    %v914 = vpop.f32.mrb[0].mxu0
    %v915 = vadd.f32 0.0, %v914
    %v916 = vpop.f32.mrb[0].mxu0
    %v917 = vadd.f32 0.0, %v916
    %v918 = vpop.f32.mrb[0].mxu0
    %v919 = vadd.f32 0.0, %v918
    %920 = vmatprep.mubr.bf16.mxu0 0
    %921 = vmatmul.mubr.bf16.gmra.mrb[0].mxu0 %v863
    %v922 = vpop.f32.mrb[0].mxu0
    %v923 = vadd.f32 0.0, %v922
    %v924 = vpop.f32.mrb[0].mxu0
    %v925 = vadd.f32 0.0, %v924
    %v926 = vpop.f32.mrb[0].mxu0
    %v927 = vadd.f32 0.0, %v926
    %v928 = vpop.f32.mrb[0].mxu0
    %v929 = vadd.f32 0.0, %v928
    %930 = vmatprep.mubr.bf16.mxu0 0
    %931 = vmatmul.mubr.bf16.gmra.mrb[0].mxu0 %v866
    %v932 = vpop.f32.mrb[0].mxu0
    %v933 = vadd.f32 0.0, %v932
    %v934 = vpop.f32.mrb[0].mxu0
    %v935 = vadd.f32 0.0, %v934
    %v936 = vpop.f32.mrb[0].mxu0
    %v937 = vadd.f32 0.0, %v936
    %v938 = vpop.f32.mrb[0].mxu0
    %v939 = vadd.f32 0.0, %v938
    %940 = vdwg.mxu0
    %v945 = vunpack.c.l.b16 %v819
    %v946 = vunpack.c.h.b16 %v819
    %v947 = vunpack.c.l.b16 %v820
    %v948 = vunpack.c.h.b16 %v820
    %v949 = vunpack.c.l.b16 %v821
    %v950 = vunpack.c.h.b16 %v821
    %v951 = vunpack.c.l.b16 %v822
    %v952 = vunpack.c.h.b16 %v822
    %v953 = vpack.c.b16 %v947, %v945
    %v954 = vpack.c.b16 %v948, %v946
    %v955 = vpack.c.b16 %v951, %v949
    %v956 = vpack.c.b16 %v952, %v950
    %v962 = vsel %vm855, %v827, 0
    %v965 = vsel %vm855, %v828, 0
    %v968 = vsel %vm855, %v829, 0
    %v971 = vsel %vm855, %v830, 0
    %973 = vmatprep.subr.bf16.mxu0 %v954
    %974 = vmatpush1.bf16.msra.mxu0 %v953
    %975 = vmatprep.subr.bf16.mxu0 %v956
    %976 = vmatpush1.bf16.msra.mxu0 %v955
    %977 = vmatprep.subr.bf16.mxu0 0
    %978 = vmatpush1.bf16.msra.mxu0 0
    %979 = vmatprep.subr.bf16.mxu0 0
    %980 = vmatpush1.bf16.msra.mxu0 0
    %981 = vmatprep.subr.bf16.mxu0 0
    %982 = vmatpush1.bf16.msra.mxu0 0
    %983 = vmatprep.subr.bf16.mxu0 0
    %984 = vmatpush1.bf16.msra.mxu0 0
    %985 = vmatprep.subr.bf16.mxu0 0
    %986 = vmatpush1.bf16.msra.mxu0 0
    %987 = vmatprep.subr.bf16.mxu0 0
    %988 = vmatpush1.bf16.msra.mxu0 0
    %989 = vmatprep.subr.bf16.mxu0 0
    %990 = vmatpush1.bf16.msra.mxu0 0
    %991 = vmatprep.subr.bf16.mxu0 0
    %992 = vmatpush1.bf16.msra.mxu0 0
    %993 = vmatprep.subr.bf16.mxu0 0
    %994 = vmatpush1.bf16.msra.mxu0 0
    %995 = vmatprep.subr.bf16.mxu0 0
    %996 = vmatpush1.bf16.msra.mxu0 0
    %997 = vmatprep.subr.bf16.mxu0 0
    %998 = vmatpush1.bf16.msra.mxu0 0
    %999 = vmatprep.subr.bf16.mxu0 0
    %1000 = vmatpush1.bf16.msra.mxu0 0
    %1001 = vmatprep.subr.bf16.mxu0 0
    %1002 = vmatpush1.bf16.msra.mxu0 0
    %1003 = vmatprep.subr.bf16.mxu0 0
    %1004 = vmatpush1.bf16.msra.mxu0 0
    %1005 = vmatprep.mubr.bf16.mxu0 0
    %1006 = vmatmul.mubr.bf16.gmra.mrb[0].mxu0 %v962
    %v1007 = vpop.f32.mrb[0].mxu0
    %v1008 = vadd.f32 %v903, %v1007
    %v1009 = vpop.f32.mrb[0].mxu0
    %v1010 = vadd.f32 %v905, %v1009
    %v1011 = vpop.f32.mrb[0].mxu0
    %v1012 = vadd.f32 %v907, %v1011
    %v1013 = vpop.f32.mrb[0].mxu0
    %v1014 = vadd.f32 %v909, %v1013
    %1015 = vmatprep.mubr.bf16.mxu0 0
    %1016 = vmatmul.mubr.bf16.gmra.mrb[0].mxu0 %v965
    %v1017 = vpop.f32.mrb[0].mxu0
    %v1018 = vadd.f32 %v913, %v1017
    %v1019 = vpop.f32.mrb[0].mxu0
    %v1020 = vadd.f32 %v915, %v1019
    %v1021 = vpop.f32.mrb[0].mxu0
    %v1022 = vadd.f32 %v917, %v1021
    %v1023 = vpop.f32.mrb[0].mxu0
    %v1024 = vadd.f32 %v919, %v1023
    %1025 = vmatprep.mubr.bf16.mxu0 0
    %1026 = vmatmul.mubr.bf16.gmra.mrb[0].mxu0 %v968
    %v1027 = vpop.f32.mrb[0].mxu0
    %v1028 = vadd.f32 %v923, %v1027
    %v1029 = vpop.f32.mrb[0].mxu0
    %v1030 = vadd.f32 %v925, %v1029
    %v1031 = vpop.f32.mrb[0].mxu0
    %v1032 = vadd.f32 %v927, %v1031
    %v1033 = vpop.f32.mrb[0].mxu0
    %v1034 = vadd.f32 %v929, %v1033
    %1035 = vmatprep.mubr.bf16.mxu0 0
    %1036 = vmatmul.mubr.bf16.gmra.mrb[0].mxu0 %v971
    %v1037 = vpop.f32.mrb[0].mxu0
    %v1038 = vadd.f32 %v933, %v1037
    %v1039 = vpop.f32.mrb[0].mxu0
    %v1040 = vadd.f32 %v935, %v1039
    %v1041 = vpop.f32.mrb[0].mxu0
    %v1042 = vadd.f32 %v937, %v1041
    %v1043 = vpop.f32.mrb[0].mxu0
    %v1044 = vadd.f32 %v939, %v1043
    %1045 = vdwg.mxu0
    %1054 = vrot.lane.b32.xlu0 %v1010, 127
    %v1055 = vpop.permute.xlu0 %1054
    %1056 = vrot.lane.b32.xlu0 %v1014, 127
    %v1057 = vpop.permute.xlu0 %1056
    %1058 = vrot.lane.b32.xlu0 %v1020, 127
    %v1059 = vpop.permute.xlu0 %1058
    %1060 = vrot.lane.b32.xlu0 %v1024, 127
    %v1061 = vpop.permute.xlu0 %1060
    %1062 = vrot.lane.b32.xlu0 %v1030, 127
    %v1063 = vpop.permute.xlu0 %1062
    %1064 = vrot.lane.b32.xlu0 %v1034, 127
    %v1065 = vpop.permute.xlu0 %1064
    %1066 = vrot.lane.b32.xlu0 %v1040, 127
    %v1067 = vpop.permute.xlu0 %1066
    %1068 = vrot.lane.b32.xlu0 %v1044, 127
    %v1069 = vpop.permute.xlu0 %1068
    %1078 = vxpose.xlu0.b32.start [1/16] %v1055, 128
    %1079 = vxpose.xlu0.b32.cont [2/16] %v1057, 128
    %1080 = vxpose.xlu0.b32.cont [3/16] %v1059, 128
    %1081 = vxpose.xlu0.b32.cont [4/16] %v1061, 128
    %1082 = vxpose.xlu0.b32.cont [5/16] %v1063, 128
    %1083 = vxpose.xlu0.b32.cont [6/16] %v1065, 128
    %1084 = vxpose.xlu0.b32.cont [7/16] %v1067, 128
    %1085 = vxpose.xlu0.b32.cont [8/16] %v1069, 128
    %1086 = vxpose.xlu0.b32.cont [9/16] 0.0, 128
    %1087 = vxpose.xlu0.b32.cont [10/16] 0.0, 128
    %1088 = vxpose.xlu0.b32.cont [11/16] 0.0, 128
    %1089 = vxpose.xlu0.b32.cont [12/16] 0.0, 128
    %1090 = vxpose.xlu0.b32.cont [13/16] 0.0, 128
    %1091 = vxpose.xlu0.b32.cont [14/16] 0.0, 128
    %1092 = vxpose.xlu0.b32.cont [15/16] 0.0, 128
    %1093 = vxpose.xlu0.b32.end [16/16] 0.0, 128
    %v1094 = vpop.trf.xlu0
    %v1095 = vpop.trf.xlu0
    %v1096 = vpop.trf.xlu0
    %v1097 = vpop.trf.xlu0
    %v1098 = vpop.trf.xlu0
    %v1099 = vpop.trf.xlu0
    %v1100 = vpop.trf.xlu0
    %v1101 = vpop.trf.xlu0
    %v1102 = vpop.trf.xlu0
    %v1103 = vpop.trf.xlu0
    %v1104 = vpop.trf.xlu0
    %v1105 = vpop.trf.xlu0
    %v1106 = vpop.trf.xlu0
    %v1107 = vpop.trf.xlu0
    %v1108 = vpop.trf.xlu0
    %v1109 = vpop.trf.xlu0
    %1110 = vset.pattern.permute.xlu0 0
    %1111 = vperm.xlu0 %1110, %v1010
    %v1112 = vpop.permute.xlu0 %1111
    %1114 = vset.pattern.permute.xlu0 0
    %1115 = vperm.xlu0 %1114, %v1014
    %v1116 = vpop.permute.xlu0 %1115
    %1118 = vset.pattern.permute.xlu0 0
    %1119 = vperm.xlu0 %1118, %v1020
    %v1120 = vpop.permute.xlu0 %1119
    %1122 = vset.pattern.permute.xlu0 0
    %1123 = vperm.xlu0 %1122, %v1024
    %v1124 = vpop.permute.xlu0 %1123
    %1126 = vset.pattern.permute.xlu0 0
    %1127 = vperm.xlu0 %1126, %v1030
    %v1128 = vpop.permute.xlu0 %1127
    %1130 = vset.pattern.permute.xlu0 0
    %1131 = vperm.xlu0 %1130, %v1034
    %v1132 = vpop.permute.xlu0 %1131
    %1134 = vset.pattern.permute.xlu0 0
    %1135 = vperm.xlu0 %1134, %v1040
    %v1136 = vpop.permute.xlu0 %1135
    %1138 = vset.pattern.permute.xlu0 0
    %1139 = vperm.xlu0 %1138, %v1044
    %v1140 = vpop.permute.xlu0 %1139
    %v1142 = vlaneseq
    %v1143 = vshrl.u32 %v1142, 7
    %v1144 = vsub.s32 0, %v1143
    %v1145 = vrot.slane %v1094, %v1144
    %v1146 = vadd.f32 %v1112, %v1145
    %v1147 = vadd.f32 %v1116, %v1145
    %v1148 = vadd.f32 %v1120, %v1145
    %v1149 = vadd.f32 %v1124, %v1145
    %v1150 = vadd.f32 %v1128, %v1145
    %v1151 = vadd.f32 %v1132, %v1145
    %v1152 = vadd.f32 %v1136, %v1145
    %v1153 = vadd.f32 %v1140, %v1145
    %v1154 = vmul.f32 %v1146, 0.2
    %v1155 = vmul.f32 %v1147, 0.2
    %v1156 = vmul.f32 %v1148, 0.2
    %v1157 = vmul.f32 %v1149, 0.2
    %v1158 = vmul.f32 %v1150, 0.2
    %v1159 = vmul.f32 %v1151, 0.2
    %v1160 = vmul.f32 %v1152, 0.2
    %v1161 = vmul.f32 %v1153, 0.2
    %v1162 = vmax.f32 %v1146, %v1154
    %v1163 = vmax.f32 %v1147, %v1155
    %v1164 = vmax.f32 %v1148, %v1156
    %v1165 = vmax.f32 %v1149, %v1157
    %v1166 = vmax.f32 %v1150, %v1158
    %v1167 = vmax.f32 %v1151, %v1159
    %v1168 = vmax.f32 %v1152, %v1160
    %v1169 = vmax.f32 %v1153, %v1161
    %v1170 = vadd.f32 %v1162, %v58
    %v1171 = vadd.f32 %v1163, %v59
    %v1172 = vadd.f32 %v1164, %v60
    %v1173 = vadd.f32 %v1165, %v61
    %v1174 = vadd.f32 %v1166, %v62
    %v1175 = vadd.f32 %v1167, %v63
    %v1176 = vadd.f32 %v1168, %v64
    %v1177 = vadd.f32 %v1169, %v65
    %v1178 = vsel %vm296, %v1170, -inf
    %1179 = vmax.xlane.f32.xlu0 %v1178
    %v1180 = vpop.xlane.xlu0 %1179
    %v1181 = vsel %vm296, %v1171, -inf
    %1182 = vmax.xlane.f32.xlu0 %v1181
    %v1183 = vpop.xlane.xlu0 %1182
    %v1184 = vsel %vm296, %v1172, -inf
    %1185 = vmax.xlane.f32.xlu0 %v1184
    %v1186 = vpop.xlane.xlu0 %1185
    %v1187 = vsel %vm296, %v1173, -inf
    %1188 = vmax.xlane.f32.xlu0 %v1187
    %v1189 = vpop.xlane.xlu0 %1188
    %v1190 = vsel %vm296, %v1174, -inf
    %1191 = vmax.xlane.f32.xlu0 %v1190
    %v1192 = vpop.xlane.xlu0 %1191
    %v1193 = vsel %vm296, %v1175, -inf
    %1194 = vmax.xlane.f32.xlu0 %v1193
    %v1195 = vpop.xlane.xlu0 %1194
    %v1196 = vsel %vm296, %v1176, -inf
    %1197 = vmax.xlane.f32.xlu0 %v1196
    %v1198 = vpop.xlane.xlu0 %1197
    %v1199 = vsel %vm296, %v1177, -inf
    %1200 = vmax.xlane.f32.xlu0 %v1199
    %v1201 = vpop.xlane.xlu0 %1200
    %v1202 = vsub.f32 %v1170, %v1180
    %v1203 = vsub.f32 %v1171, %v1183
    %v1204 = vsub.f32 %v1172, %v1186
    %v1205 = vsub.f32 %v1173, %v1189
    %v1206 = vsub.f32 %v1174, %v1192
    %v1207 = vsub.f32 %v1175, %v1195
    %v1208 = vsub.f32 %v1176, %v1198
    %v1209 = vsub.f32 %v1177, %v1201
    %v1210 = vmul.f32 %v1202, 1.442695
    %v1211 = vpow.pop %v1210
    %v1212 = vmul.f32 %v1203, 1.442695
    %v1213 = vpow.pop %v1212
    %v1214 = vmul.f32 %v1204, 1.442695
    %v1215 = vpow.pop %v1214
    %v1216 = vmul.f32 %v1205, 1.442695
    %v1217 = vpow.pop %v1216
    %v1218 = vmul.f32 %v1206, 1.442695
    %v1219 = vpow.pop %v1218
    %v1220 = vmul.f32 %v1207, 1.442695
    %v1221 = vpow.pop %v1220
    %v1222 = vmul.f32 %v1208, 1.442695
    %v1223 = vpow.pop %v1222
    %v1224 = vmul.f32 %v1209, 1.442695
    %v1225 = vpow.pop %v1224
    %v1226 = vsel %vm296, %v1211, 0.0
    %1227 = vadd.xlane.f32.xlu0 %v1226
    %v1228 = vpop.xlane.xlu0 %1227
    %v1229 = vsel %vm296, %v1213, 0.0
    %1230 = vadd.xlane.f32.xlu0 %v1229
    %v1231 = vpop.xlane.xlu0 %1230
    %v1232 = vsel %vm296, %v1215, 0.0
    %1233 = vadd.xlane.f32.xlu0 %v1232
    %v1234 = vpop.xlane.xlu0 %1233
    %v1235 = vsel %vm296, %v1217, 0.0
    %1236 = vadd.xlane.f32.xlu0 %v1235
    %v1237 = vpop.xlane.xlu0 %1236
    %v1238 = vsel %vm296, %v1219, 0.0
    %1239 = vadd.xlane.f32.xlu0 %v1238
    %v1240 = vpop.xlane.xlu0 %1239
    %v1241 = vsel %vm296, %v1221, 0.0
    %1242 = vadd.xlane.f32.xlu0 %v1241
    %v1243 = vpop.xlane.xlu0 %1242
    %v1244 = vsel %vm296, %v1223, 0.0
    %1245 = vadd.xlane.f32.xlu0 %v1244
    %v1246 = vpop.xlane.xlu0 %1245
    %v1247 = vsel %vm296, %v1225, 0.0
    %1248 = vadd.xlane.f32.xlu0 %v1247
    %v1249 = vpop.xlane.xlu0 %1248
    %v1250 = vrcp.pop %v1228
    %v1251 = vrcp.pop %v1231
    %v1252 = vrcp.pop %v1234
    %v1253 = vrcp.pop %v1237
    %v1254 = vrcp.pop %v1240
    %v1255 = vrcp.pop %v1243
    %v1256 = vrcp.pop %v1246
    %v1257 = vrcp.pop %v1249
    %v1258 = vpack.c.bf16 %v1213, %v1211
    %v1259 = vpack.c.bf16 %v1217, %v1215
    %v1260 = vpack.c.bf16 %v1221, %v1219
    %v1261 = vpack.c.bf16 %v1225, %v1223
    %v1262 = vpack.c.bf16 %v1012, %v1008
    %v1263 = vpack.c.bf16 %v1022, %v1018
    %v1264 = vpack.c.bf16 %v1032, %v1028
    %v1265 = vpack.c.bf16 %v1042, %v1038
    %v1267 = vsel %vm296, %v1258, 0
    %v1270 = vsel %vm296, %v1259, 0
    %v1273 = vsel %vm296, %v1260, 0
    %v1276 = vsel %vm296, %v1261, 0
    %1278 = vmatprep.subr.bf16.mxu0 0
    %1279 = vmatpush1.bf16.msra.mxu0 %v1262
    %1280 = vmatprep.subr.bf16.mxu0 0
    %1281 = vmatpush1.bf16.msra.mxu0 %v1263
    %1282 = vmatprep.subr.bf16.mxu0 0
    %1283 = vmatpush1.bf16.msra.mxu0 %v1264
    %1284 = vmatprep.subr.bf16.mxu0 0
    %1285 = vmatpush1.bf16.msra.mxu0 %v1265
    %1286 = vmatprep.subr.bf16.mxu0 0
    %1287 = vmatpush1.bf16.msra.mxu0 0
    %1288 = vmatprep.subr.bf16.mxu0 0
    %1289 = vmatpush1.bf16.msra.mxu0 0
    %1290 = vmatprep.subr.bf16.mxu0 0
    %1291 = vmatpush1.bf16.msra.mxu0 0
    %1292 = vmatprep.subr.bf16.mxu0 0
    %1293 = vmatpush1.bf16.msra.mxu0 0
    %1294 = vmatprep.subr.bf16.mxu0 0
    %1295 = vmatpush1.bf16.msra.mxu0 0
    %1296 = vmatprep.subr.bf16.mxu0 0
    %1297 = vmatpush1.bf16.msra.mxu0 0
    %1298 = vmatprep.subr.bf16.mxu0 0
    %1299 = vmatpush1.bf16.msra.mxu0 0
    %1300 = vmatprep.subr.bf16.mxu0 0
    %1301 = vmatpush1.bf16.msra.mxu0 0
    %1302 = vmatprep.subr.bf16.mxu0 0
    %1303 = vmatpush1.bf16.msra.mxu0 0
    %1304 = vmatprep.subr.bf16.mxu0 0
    %1305 = vmatpush1.bf16.msra.mxu0 0
    %1306 = vmatprep.subr.bf16.mxu0 0
    %1307 = vmatpush1.bf16.msra.mxu0 0
    %1308 = vmatprep.subr.bf16.mxu0 0
    %1309 = vmatpush1.bf16.msra.mxu0 0
    %1310 = vmatprep.mubr.bf16.mxu0 0
    %1311 = vmatmul.mubr.bf16.gmra.mrb[0].mxu0 %v1267
    %v1312 = vpop.f32.mrb[0].mxu0
    %v1313 = vadd.f32 0.0, %v1312
    %v1314 = vpop.f32.mrb[0].mxu0
    %v1315 = vpop.f32.mrb[0].mxu0
    %v1316 = vadd.f32 0.0, %v1315
    %v1317 = vpop.f32.mrb[0].mxu0
    %1318 = vmatprep.mubr.bf16.mxu0 0
    %1319 = vmatmul.mubr.bf16.gmra.mrb[0].mxu0 %v1270
    %v1320 = vpop.f32.mrb[0].mxu0
    %v1321 = vadd.f32 0.0, %v1320
    %v1322 = vpop.f32.mrb[0].mxu0
    %v1323 = vpop.f32.mrb[0].mxu0
    %v1324 = vadd.f32 0.0, %v1323
    %v1325 = vpop.f32.mrb[0].mxu0
    %1326 = vmatprep.mubr.bf16.mxu0 0
    %1327 = vmatmul.mubr.bf16.gmra.mrb[0].mxu0 %v1273
    %v1328 = vpop.f32.mrb[0].mxu0
    %v1329 = vadd.f32 0.0, %v1328
    %v1330 = vpop.f32.mrb[0].mxu0
    %v1331 = vpop.f32.mrb[0].mxu0
    %v1332 = vadd.f32 0.0, %v1331
    %v1333 = vpop.f32.mrb[0].mxu0
    %1334 = vmatprep.mubr.bf16.mxu0 0
    %1335 = vmatmul.mubr.bf16.gmra.mrb[0].mxu0 %v1276
    %v1336 = vpop.f32.mrb[0].mxu0
    %v1337 = vadd.f32 0.0, %v1336
    %v1338 = vpop.f32.mrb[0].mxu0
    %v1339 = vpop.f32.mrb[0].mxu0
    %v1340 = vadd.f32 0.0, %v1339
    %v1341 = vpop.f32.mrb[0].mxu0
    %1342 = vdwg.mxu0
    %v1343 = vmul.f32 %v1313, %v1250
    %v1344 = vmul.f32 %v1316, %v1251
    %v1345 = vmul.f32 %v1321, %v1252
    %v1346 = vmul.f32 %v1324, %v1253
    %v1347 = vmul.f32 %v1329, %v1254
    %v1348 = vmul.f32 %v1332, %v1255
    %v1349 = vmul.f32 %v1337, %v1256
    %v1350 = vmul.f32 %v1340, %v1257
    %vm1351 = vcmp.gt.f32.partialorder %v1343, 0.0
    %vm1352 = vcmp.gt.f32.partialorder %v1344, 0.0
    %vm1353 = vcmp.gt.f32.partialorder %v1345, 0.0
    %vm1354 = vcmp.gt.f32.partialorder %v1346, 0.0
    %vm1355 = vcmp.gt.f32.partialorder %v1347, 0.0
    %vm1356 = vcmp.gt.f32.partialorder %v1348, 0.0
    %vm1357 = vcmp.gt.f32.partialorder %v1349, 0.0
    %vm1358 = vcmp.gt.f32.partialorder %v1350, 0.0
    %v1359 = vmin.f32 %v1343, 0.0
    %v1360 = vmin.f32 %v1344, 0.0
    %v1361 = vmin.f32 %v1345, 0.0
    %v1362 = vmin.f32 %v1346, 0.0
    %v1363 = vmin.f32 %v1347, 0.0
    %v1364 = vmin.f32 %v1348, 0.0
    %v1365 = vmin.f32 %v1349, 0.0
    %v1366 = vmin.f32 %v1350, 0.0
    %v1367 = vmul.f32 %v1359, 1.442695
    %v1368 = vpow.pop %v1367
    %v1369 = vmul.f32 %v1360, 1.442695
    %v1370 = vpow.pop %v1369
    %v1371 = vmul.f32 %v1361, 1.442695
    %v1372 = vpow.pop %v1371
    %v1373 = vmul.f32 %v1362, 1.442695
    %v1374 = vpow.pop %v1373
    %v1375 = vmul.f32 %v1363, 1.442695
    %v1376 = vpow.pop %v1375
    %v1377 = vmul.f32 %v1364, 1.442695
    %v1378 = vpow.pop %v1377
    %v1379 = vmul.f32 %v1365, 1.442695
    %v1380 = vpow.pop %v1379
    %v1381 = vmul.f32 %v1366, 1.442695
    %v1382 = vpow.pop %v1381
    %v1383 = vsub.f32 %v1368, 1.0
    %v1384 = vsub.f32 %v1370, 1.0
    %v1385 = vsub.f32 %v1372, 1.0
    %v1386 = vsub.f32 %v1374, 1.0
    %v1387 = vsub.f32 %v1376, 1.0
    %v1388 = vsub.f32 %v1378, 1.0
    %v1389 = vsub.f32 %v1380, 1.0
    %v1390 = vsub.f32 %v1382, 1.0
    %v1391 = vsel %vm1351, %v1343, %v1383
    %v1392 = vsel %vm1352, %v1344, %v1384
    %v1393 = vsel %vm1353, %v1345, %v1385
    %v1394 = vsel %vm1354, %v1346, %v1386
    %v1395 = vsel %vm1355, %v1347, %v1387
    %v1396 = vsel %vm1356, %v1348, %v1388
    %v1397 = vsel %vm1357, %v1349, %v1389
    %v1398 = vsel %vm1358, %v1350, %v1390
    %v1399 = vlaneseq
    %v1400 = vand.u32 %v1399, 127
    %vm1401 = vcmp.lt.s32.totalorder %v1400, 8
    %v1402 = vsel %vm1401, 0.0, -1e+30
    %v1403 = vadd.f32 %v1391, %v1402
    %v1404 = vadd.f32 %v1392, %v1402
    %v1405 = vadd.f32 %v1393, %v1402
    %v1406 = vadd.f32 %v1394, %v1402
    %v1407 = vadd.f32 %v1395, %v1402
    %v1408 = vadd.f32 %v1396, %v1402
    %v1409 = vadd.f32 %v1397, %v1402
    %v1410 = vadd.f32 %v1398, %v1402
    %1411 = vmax.xlane.f32.xlu0 %v1403
    %v1412 = vpop.xlane.xlu0 %1411
    %1413 = vmax.xlane.f32.xlu0 %v1404
    %v1414 = vpop.xlane.xlu0 %1413
    %1415 = vmax.xlane.f32.xlu0 %v1405
    %v1416 = vpop.xlane.xlu0 %1415
    %1417 = vmax.xlane.f32.xlu0 %v1406
    %v1418 = vpop.xlane.xlu0 %1417
    %1419 = vmax.xlane.f32.xlu0 %v1407
    %v1420 = vpop.xlane.xlu0 %1419
    %1421 = vmax.xlane.f32.xlu0 %v1408
    %v1422 = vpop.xlane.xlu0 %1421
    %1423 = vmax.xlane.f32.xlu0 %v1409
    %v1424 = vpop.xlane.xlu0 %1423
    %1425 = vmax.xlane.f32.xlu0 %v1410
    %v1426 = vpop.xlane.xlu0 %1425
    %v1427 = vsub.f32 %v1403, %v1412
    %v1428 = vsub.f32 %v1404, %v1414
    %v1429 = vsub.f32 %v1405, %v1416
    %v1430 = vsub.f32 %v1406, %v1418
    %v1431 = vsub.f32 %v1407, %v1420
    %v1432 = vsub.f32 %v1408, %v1422
    %v1433 = vsub.f32 %v1409, %v1424
    %v1434 = vsub.f32 %v1410, %v1426
    %v1435 = vmul.f32 %v1427, 1.442695
    %v1436 = vpow.pop %v1435
    %v1437 = vmul.f32 %v1428, 1.442695
    %v1438 = vpow.pop %v1437
    %v1439 = vmul.f32 %v1429, 1.442695
    %v1440 = vpow.pop %v1439
    %v1441 = vmul.f32 %v1430, 1.442695
    %v1442 = vpow.pop %v1441
    %v1443 = vmul.f32 %v1431, 1.442695
    %v1444 = vpow.pop %v1443
    %v1445 = vmul.f32 %v1432, 1.442695
    %v1446 = vpow.pop %v1445
    %v1447 = vmul.f32 %v1433, 1.442695
    %v1448 = vpow.pop %v1447
    %v1449 = vmul.f32 %v1434, 1.442695
    %v1450 = vpow.pop %v1449
    %1451 = vadd.xlane.f32.xlu0 %v1436
    %v1452 = vpop.xlane.xlu0 %1451
    %1453 = vadd.xlane.f32.xlu0 %v1438
    %v1454 = vpop.xlane.xlu0 %1453
    %1455 = vadd.xlane.f32.xlu0 %v1440
    %v1456 = vpop.xlane.xlu0 %1455
    %1457 = vadd.xlane.f32.xlu0 %v1442
    %v1458 = vpop.xlane.xlu0 %1457
    %1459 = vadd.xlane.f32.xlu0 %v1444
    %v1460 = vpop.xlane.xlu0 %1459
    %1461 = vadd.xlane.f32.xlu0 %v1446
    %v1462 = vpop.xlane.xlu0 %1461
    %1463 = vadd.xlane.f32.xlu0 %v1448
    %v1464 = vpop.xlane.xlu0 %1463
    %1465 = vadd.xlane.f32.xlu0 %v1450
    %v1466 = vpop.xlane.xlu0 %1465
    %v1467 = vrcp.pop %v1452
    %v1468 = vmul.f32 %v1436, %v1467
    %v1469 = vrcp.pop %v1454
    %v1470 = vmul.f32 %v1438, %v1469
    %v1471 = vrcp.pop %v1456
    %v1472 = vmul.f32 %v1440, %v1471
    %v1473 = vrcp.pop %v1458
    %v1474 = vmul.f32 %v1442, %v1473
    %v1475 = vrcp.pop %v1460
    %v1476 = vmul.f32 %v1444, %v1475
    %v1477 = vrcp.pop %v1462
    %v1478 = vmul.f32 %v1446, %v1477
    %v1479 = vrcp.pop %v1464
    %v1480 = vmul.f32 %v1448, %v1479
    %v1481 = vrcp.pop %v1466
    %v1482 = vmul.f32 %v1450, %v1481
    %1483 = vst [vmem:[%s4] sm:$0xff] %v1468
    %1484 = vst [vmem:[%s4 + $0x8] sm:$0xff] %v1470
    %1485 = vst [vmem:[%s4 + $0x10] sm:$0xff] %v1472
    %1486 = vst [vmem:[%s4 + $0x18] sm:$0xff] %v1474
    %1487 = vst [vmem:[%s4 + $0x20] sm:$0xff] %v1476
    %1488 = vst [vmem:[%s4 + $0x28] sm:$0xff] %v1478
    %1489 = vst [vmem:[%s4 + $0x30] sm:$0xff] %v1480
    %1490 = vst [vmem:[%s4 + $0x38] sm:$0xff] %v1482
    // Predicated region
    $region22: #{gat_forward_pallas.1} parent=1 // pred_check
      _
    $region23: #{gat_forward_pallas.1} parent=1 // pred_check_branch
      %1492 = sbr.rel (0) target = $region25
    $region24: #{gat_forward_pallas.1} parent=1 // pred_region
      _
    $region25: #{gat_forward_pallas.1} parent=1 // pred_fallthru
      _
    // Predicated region
    $region26: #{gat_forward_pallas.1} parent=1 // pred_check
      _
    $region27: #{gat_forward_pallas.1} parent=1 // pred_check_branch
      %1494 = sbr.rel (0) target = $region29
    $region28: #{gat_forward_pallas.1} parent=1 // pred_region
      _
    $region29: #{gat_forward_pallas.1} parent=1 // pred_fallthru
      _
    %1495 = vsyncpa [#allocation3], 1

</llo_original>
